<compile_context>
chip_gen: v6e
topology: v6e:2x2x1
jax: 0.10.0
libtpu: 0.0.40
codegen_flags: <defaults>
</compile_context>

<pallas_src>
import functools

import jax
import jax.numpy as jnp
from jax.experimental import pallas as pl
from jax.experimental.pallas import tpu as pltpu


def _row_tile(n, cap=2048):
    """Largest divisor of n that is <= cap and a multiple of 8 (sublane friendly).

    Falls back to the full extent n (single hw step) only when no multiple-of-8 divisor
    exists; for this module n = size*size, so that only happens for tiny sizes where the
    full block is a few KB anyway.
    """
    best = None
    for d in range(1, int(n ** 0.5) + 1):
        if n % d == 0:
            for t in (d, n // d):
                if t <= cap and t % 8 == 0 and (best is None or t > best):
                    best = t
    return best if best is not None else n


# ----------------------------------------------------------------------------
# Kernel 1: single pass over feat.
#   dense path : x = scale_sel[b]*feat + shift_sel[b] ; relu(x@W1^T+b1)@W2^T+b2,
#                stored transposed as (C, tile) -> output layout (B, C, hw).
#   sparse path: Y[b] += Ws1_tile @ feat_tile  (accumulated over the hw grid axis).
# ----------------------------------------------------------------------------
def _dense_and_contract_kernel(scale_sel_ref, feat_ref, shift_sel_ref,
                               w1_ref, b1_ref, w2_ref, b2_ref, ws1_ref,
                               dense_ref, y_ref):
    b = pl.program_id(0)
    t = pl.program_id(1)

    feat = feat_ref[0]                                      # (tile, C) f32
    feat_bf = feat.astype(jnp.bfloat16)

    # ---- sparse_fc_1 contraction, accumulated into the resident (1, H2, C) output ----
    @pl.when(t == 0)
    def _():
        y_ref[...] = jnp.zeros_like(y_ref)
    y_ref[0] += jnp.dot(ws1_ref[...], feat_bf, preferred_element_type=jnp.float32)

    # ---- dense path: adapter affine (selected class) + fc1 -> relu -> fc2 ----
    # Affine in f32 (safe on v5e), cast to bf16 right before each MXU dot.
    x = feat * scale_sel_ref[b] + shift_sel_ref[0]          # (tile, C) f32
    h = jnp.dot(x.astype(jnp.bfloat16), w1_ref[...],
                preferred_element_type=jnp.float32) + b1_ref[...]
    h = jnp.maximum(h, 0.0)
    out = jnp.dot(h.astype(jnp.bfloat16), w2_ref[...],
                  preferred_element_type=jnp.float32) + b2_ref[...]
    # In-kernel transpose (XLU slot, otherwise idle) -> lane-dense (C, tile) store.
    dense_ref[0] = out.T


def dense_and_contract(feat, scale_sel, shift_sel, w1_bf, b1, w2_bf, b2, ws1_bf,
                       *, row_cap=2048):
    B, hw, C = feat.shape
    H1 = w1_bf.shape[1]
    H2 = ws1_bf.shape[0]
    tile = _row_tile(hw, row_cap)
    return pl.pallas_call(
        _dense_and_contract_kernel,
        out_shape=(jax.ShapeDtypeStruct((B, C, hw), jnp.float32),     # dense, (B,C,hw)
                   jax.ShapeDtypeStruct((B, H2, C), jnp.float32)),    # Y = Ws1 @ feat[b]
        grid=(B, hw // tile),
        in_specs=[
            pl.BlockSpec(memory_space=pltpu.MemorySpace.SMEM),        # scale_sel (B,)
            pl.BlockSpec((1, tile, C), lambda b, t: (b, t, 0)),       # feat (f32)
            pl.BlockSpec((1, 1, C), lambda b, t: (b, 0, 0)),          # shift_sel (B,1,C)
            pl.BlockSpec((C, H1), lambda b, t: (0, 0)),               # W1^T  bf16
            pl.BlockSpec((1, H1), lambda b, t: (0, 0)),               # b1    f32
            pl.BlockSpec((H1, C), lambda b, t: (0, 0)),               # W2^T  bf16
            pl.BlockSpec((1, C), lambda b, t: (0, 0)),                # b2    f32
            pl.BlockSpec((H2, tile), lambda b, t: (0, t)),            # Ws1   bf16
        ],
        out_specs=[
            pl.BlockSpec((1, C, tile), lambda b, t: (b, 0, t)),       # dense (B,C,hw)
            pl.BlockSpec((1, H2, C), lambda b, t: (b, 0, 0)),         # Y accumulator
        ],
        compiler_params=pltpu.CompilerParams(
            dimension_semantics=("parallel", "arbitrary")),
    )(scale_sel, feat, shift_sel, w1_bf, b1.reshape(1, H1), w2_bf, b2.reshape(1, C),
      ws1_bf)


# ----------------------------------------------------------------------------
# Kernel 2: sparse epilogue on the tiny per-batch result Y = Ws1 @ feat[b].
#   h[o] = scale[o]*Y + rowsum(Ws1)[:,None]*shift[o] + bs1 ; relu ; Ws2 @ h[o] + bs2
#   + fused pos/neg token-embedding add (pos for the selected class, neg otherwise).
# All 7 classes evaluated in one grid step (vectorized affine; 7 tiny static MXU dots,
# negligible vs. the main contraction).
# ----------------------------------------------------------------------------
def _sparse_epilogue_kernel(cls_idx_ref, y_ref, scale_ref, shift_ref, rowsum_ref,
                            bs1_ref, bs2_ref, ws2_ref, emb_pos_ref, emb_neg_ref,
                            o_ref):
    b = pl.program_id(0)
    num_cls = o_ref.shape[1]

    y = y_ref[0]                                            # (H2, C) f32
    # (nc,1,C)*(1,H2,C) + (1,H2,1)*(nc,1,C) + (1,H2,1) -> (nc, H2, C)
    h = scale_ref[...] * y[None] + rowsum_ref[...] * shift_ref[...] + bs1_ref[...]
    h = jnp.maximum(h, 0.0).astype(jnp.bfloat16)

    ws2 = ws2_ref[...]                                      # (T, H2) bf16
    emb_neg = emb_neg_ref[...]                              # (T, C)  f32
    emb_diff = emb_pos_ref[...] - emb_neg                   # (T, C)  f32
    cls_sel = cls_idx_ref[b]
    for o in range(num_cls):                                # static unroll (num_cls = 7)
        sp = jnp.dot(ws2, h[o], preferred_element_type=jnp.float32) + bs2_ref[...]
        sel = (cls_sel == o).astype(jnp.float32)            # 1.0 for the selected class
        o_ref[0, o] = sp + emb_neg + sel * emb_diff


def sparse_epilogue(y, cls_idx, scale, shift, ws1_rowsum, bs1, ws2_bf, bs2,
                    emb_pos, emb_neg, *, num_cls, num_tokens):
    B, H2, C = y.shape
    T = num_tokens
    scale3 = jnp.broadcast_to(scale[:, None, None], (num_cls, 1, C))
    shift3 = shift[:, None, :]
    return pl.pallas_call(
        _sparse_epilogue_kernel,
        out_shape=jax.ShapeDtypeStruct((B, num_cls, T, C), jnp.float32),
        grid=(B,),
        in_specs=[
            pl.BlockSpec(memory_space=pltpu.MemorySpace.SMEM),        # cls_idx (B,) i32
            pl.BlockSpec((1, H2, C), lambda b: (b, 0, 0)),            # Y
            pl.BlockSpec((num_cls, 1, C), lambda b: (0, 0, 0)),       # scale
            pl.BlockSpec((num_cls, 1, C), lambda b: (0, 0, 0)),       # shift
            pl.BlockSpec((1, H2, 1), lambda b: (0, 0, 0)),            # rowsum(Ws1)
            pl.BlockSpec((1, H2, 1), lambda b: (0, 0, 0)),            # bs1
            pl.BlockSpec((T, 1), lambda b: (0, 0)),                   # bs2
            pl.BlockSpec((T, H2), lambda b: (0, 0)),                  # Ws2 bf16
            pl.BlockSpec((T, C), lambda b: (0, 0)),                   # emb_pos
            pl.BlockSpec((T, C), lambda b: (0, 0)),                   # emb_neg
        ],
        out_specs=pl.BlockSpec((1, num_cls, T, C), lambda b: (b, 0, 0, 0)),
        compiler_params=pltpu.CompilerParams(dimension_semantics=("parallel",)),
    )(cls_idx, y, scale3, shift3, ws1_rowsum.reshape(1, H2, 1), bs1.reshape(1, H2, 1),
      bs2.reshape(T, 1), ws2_bf, emb_pos, emb_neg)


# ----------------------------------------------------------------------------
# Full Prototype_Prompt_Encoder forward.
# ----------------------------------------------------------------------------
def prototype_prompt_encoder_forward(params, feat, prototypes, cls_ids, *,
                                     size, num_cls=7, num_tokens=8):
    B, hw, C = feat.shape
    assert hw == size * size

    # ---- Prompt_enhance_adapter, factorized (see module docstring) ----------
    wp, bp = params["wp"], params["bp"]                                 # (7,14), (7,)
    scale = 2.0 * jnp.sum(wp[:, :num_cls], axis=1)                      # (num_cls,)
    shift = 2.0 * (wp[:, num_cls:] @ prototypes) + bp[:, None]          # (num_cls, C)

    cls_idx = (cls_ids - 1).astype(jnp.int32)                           # (B,)
    scale_sel = scale[cls_idx]                                          # (B,)
    shift_sel = shift[cls_idx][:, None, :]                              # (B, 1, C)

    # bf16 weights for the MXU (accumulation stays f32 inside the kernels).
    w1_bf = params["w1_t"].astype(jnp.bfloat16)
    w2_bf = params["w2_t"].astype(jnp.bfloat16)
    ws1_bf = params["ws1"].astype(jnp.bfloat16)
    ws2_bf = params["ws2"].astype(jnp.bfloat16)
    ws1_rowsum = jnp.sum(params["ws1"], axis=1)                         # (H2,) f32

    # ---- kernel 1: single pass over feat -> dense embeddings (B,C,hw) and Y ----
    dense_out, y = dense_and_contract(feat, scale_sel, shift_sel,
                                      w1_bf, params["b1"], w2_bf, params["b2"], ws1_bf)
    dense_embeddings = dense_out.reshape(B, C, size, size)              # free reshape

    # ---- kernel 2: per-class sparse epilogue (+ fused pos/neg embeddings) ----
    sparse = sparse_epilogue(y, cls_idx, scale, shift, ws1_rowsum,
                             params["bs1"], ws2_bf, params["bs2"],
                             params["emb_pos"], params["emb_neg"],
                             num_cls=num_cls, num_tokens=num_tokens)    # (B,7,T,C)
    sparse_embeddings = sparse.reshape(B, num_cls * num_tokens, C)
    return dense_embeddings, sparse_embeddings


# ----------------------------------------------------------------------------
# Pure-jnp f32 reference (unfactorized adapter, identity WMS/PCSA) for verification.
# ----------------------------------------------------------------------------
def _reference(params, feat, prototypes, cls_ids, *, size, num_cls, num_tokens):
    B, hw, C = feat.shape
    cls_prompts = jnp.broadcast_to(prototypes[None, :, None, :], (B, num_cls, hw, C))
    feat_st = jnp.broadcast_to(feat[:, None], (B, num_cls, hw, C))
    combined = jnp.concatenate([feat_st, cls_prompts], axis=1)          # (B, 2nc, hw, C)
    fused3 = 2.0 * combined
    wp, bp = params["wp"], params["bp"]
    feat_adapted = jnp.einsum("oi,bihc->bohc", wp, fused3) + bp[None, :, None, None]

    cls_idx = cls_ids - 1
    sel = feat_adapted[jnp.arange(B), cls_idx]                          # (B, hw, C)
    h = jnp.maximum(sel @ params["w1_t"] + params["b1"], 0.0)
    dense = h @ params["w2_t"] + params["b2"]
    dense_embeddings = jnp.transpose(dense.reshape(B, size, size, C), (0, 3, 1, 2))

    xs = feat_adapted.reshape(B * num_cls, hw, C)
    h = jnp.maximum(jnp.einsum("jh,bhc->bjc", params["ws1"], xs)
                    + params["bs1"][None, :, None], 0.0)
    sp = jnp.einsum("tj,bjc->btc", params["ws2"], h) + params["bs2"][None, :, None]
    sp = sp.reshape(B, num_cls, num_tokens, C)

    one_hot = jax.nn.one_hot(cls_idx, num_cls, dtype=jnp.float32)
    pos = params["emb_pos"][None, None] * one_hot[:, :, None, None]
    neg = params["emb_neg"][None, None] * (1.0 - one_hot)[:, :, None, None]
    sparse_embeddings = (sp + pos + neg).reshape(B, num_cls * num_tokens, C)
    return dense_embeddings, sparse_embeddings


# ----------------------------------------------------------------------------
# Deterministic parameter init (shapes from the module __init__).
# ----------------------------------------------------------------------------
def init_params(key, feat_dim, hidden_dense, hidden_sparse, size, num_tokens, num_cls=7):
    hw = size * size
    ks = jax.random.split(key, 12)

    def w(k, shape, fan_in):
        return jax.random.normal(k, shape, jnp.float32) / jnp.sqrt(float(fan_in))

    return dict(
        # adapter.channel_projection : Conv2d(2*num_cls, num_cls, 1) — weight (out, in)
        wp=w(ks[0], (num_cls, 2 * num_cls), 2 * num_cls),
        bp=w(ks[1], (num_cls,), 2 * num_cls),
        # dense_fc_1 : Conv2d(feat_dim, hidden_dense, 1) ; dense_fc_2 : Conv2d(hidden_dense, feat_dim, 1)
        w1_t=w(ks[2], (feat_dim, hidden_dense), feat_dim),
        b1=w(ks[3], (hidden_dense,), feat_dim),
        w2_t=w(ks[4], (hidden_dense, feat_dim), hidden_dense),
        b2=w(ks[5], (feat_dim,), hidden_dense),
        # sparse_fc_1 : Conv1d(size*size, hidden_sparse, 1) ; sparse_fc_2 : Conv1d(hidden_sparse, num_tokens, 1)
        ws1=w(ks[6], (hidden_sparse, hw), hw),
        bs1=w(ks[7], (hidden_sparse,), hw),
        ws2=w(ks[8], (num_tokens, hidden_sparse), hidden_sparse),
        bs2=w(ks[9], (num_tokens,), hidden_sparse),
        # pn_cls_embeddings[0] (neg), pn_cls_embeddings[1] (pos) : Embedding(num_tokens, feat_dim)
        emb_neg=jax.random.normal(ks[10], (num_tokens, feat_dim), jnp.float32),
        emb_pos=jax.random.normal(ks[11], (num_tokens, feat_dim), jnp.float32),
    )


if __name__ == "__main__":
    # Small, lane-aligned shapes consistent with the forward (reference: feat_dim=256,
    # size=64->hw=4096, hidden=128):  feat_dim=128, size=8->hw=64, hidden=32, tokens=8.
    B, C, size, num_cls, num_tokens = 2, 128, 8, 7, 8
    hidden_dense = hidden_sparse = 32
    hw = size * size

    key = jax.random.PRNGKey(0)
    k_feat, k_proto, k_cls, k_params = jax.random.split(key, 4)
    feat = jax.random.normal(k_feat, (B, hw, C), jnp.float32)           # (B, hw, feat_dim)
    prototypes = jax.random.normal(k_proto, (num_cls, C), jnp.float32)  # (num_cls, feat_dim)
    cls_ids = jax.random.randint(k_cls, (B,), 1, num_cls + 1)           # values in [1, 7]

    params = init_params(k_params, C, hidden_dense, hidden_sparse, size, num_tokens, num_cls)

    fwd = jax.jit(functools.partial(prototype_prompt_encoder_forward,
                                    size=size, num_cls=num_cls, num_tokens=num_tokens))
    dense_embeddings, sparse_embeddings = fwd(params, feat, prototypes, cls_ids)
    jax.block_until_ready((dense_embeddings, sparse_embeddings))

    assert dense_embeddings.shape == (B, C, size, size)
    assert sparse_embeddings.shape == (B, num_cls * num_tokens, C)

    # Numerical check vs. the unfactorized f32 reference.  Kernel matmul operands are
    # bf16 (f32 accumulation), so allow bf16-level mixed abs/rel tolerance.
    ref_dense, ref_sparse = _reference(params, feat, prototypes, cls_ids,
                                       size=size, num_cls=num_cls, num_tokens=num_tokens)

    def _check(out, ref):
        err = jnp.abs(out - ref)
        tol = 5e-2 + 3e-2 * jnp.abs(ref)
        assert bool(jnp.all(err <= tol)), float(jnp.max(err))

    _check(dense_embeddings, ref_dense)
    _check(sparse_embeddings, ref_sparse)

    print("KERNEL_OK")
</pallas_src>

<mosaic_0001>
module attributes {stable_mosaic.version = 11 : i64} {
  func.func @_dense_and_contract_kernel(%arg0: i32, %arg1: i32, %arg2: memref<2xf32, #tpu.memory_space<smem>>, %arg3: memref<1x64x128xf32, #tpu.memory_space<vmem>>, %arg4: memref<1x1x128xf32, #tpu.memory_space<vmem>>, %arg5: memref<128x32xbf16, #tpu.memory_space<vmem>>, %arg6: memref<1x32xf32, #tpu.memory_space<vmem>>, %arg7: memref<32x128xbf16, #tpu.memory_space<vmem>>, %arg8: memref<1x128xf32, #tpu.memory_space<vmem>>, %arg9: memref<32x64xbf16, #tpu.memory_space<vmem>>, %arg10: memref<1x128x64xf32, #tpu.memory_space<vmem>>, %arg11: memref<1x32x128xf32, #tpu.memory_space<vmem>>) attributes {dimension_semantics = [#tpu.dimension_semantics<parallel>, #tpu.dimension_semantics<arbitrary>], iteration_bounds = array<i64: 2, 1>, scalar_prefetch = 0 : i64, scratch_operands = 0 : i64, tpu.core_type = #tpu.core_type<tc>, window_params = [{transform_indices = @transform_0, window_bounds = array<i64: 2>}, {transform_indices = @transform_1, window_bounds = array<i64: 1, 64, 128>}, {transform_indices = @transform_2, window_bounds = array<i64: 1, 1, 128>}, {pipeline_mode = #tpu.pipeline_mode<synchronous>, transform_indices = @transform_3, window_bounds = array<i64: 128, 32>}, {pipeline_mode = #tpu.pipeline_mode<synchronous>, transform_indices = @transform_4, window_bounds = array<i64: 1, 32>}, {pipeline_mode = #tpu.pipeline_mode<synchronous>, transform_indices = @transform_5, window_bounds = array<i64: 32, 128>}, {pipeline_mode = #tpu.pipeline_mode<synchronous>, transform_indices = @transform_6, window_bounds = array<i64: 1, 128>}, {transform_indices = @transform_7, window_bounds = array<i64: 32, 64>}, {transform_indices = @transform_8, window_bounds = array<i64: 1, 128, 64>}, {transform_indices = @transform_9, window_bounds = array<i64: 1, 32, 128>}]} {
    %c0 = arith.constant 0 : index
    %c0_0 = arith.constant 0 : index
    %c0_1 = arith.constant 0 : index
    %0 = vector.load %arg3[%c0, %c0_0, %c0_1] : memref<1x64x128xf32, #tpu.memory_space<vmem>>, vector<1x64x128xf32>
    %1 = vector.shape_cast %0 : vector<1x64x128xf32> to vector<64x128xf32>
    %2 = arith.truncf %1 : vector<64x128xf32> to vector<64x128xbf16>
    %c0_i32 = arith.constant 0 : i32
    %3 = arith.cmpi eq, %arg1, %c0_i32 : i32
    %4 = arith.extui %3 : i1 to i32
    %c0_i32_2 = arith.constant 0 : i32
    %5 = arith.cmpi ne, %4, %c0_i32_2 : i32
    scf.if %5 {
      %cst_28 = arith.constant 0.000000e+00 : f32
      %40 = vector.broadcast %cst_28 : f32 to vector<1x32x128xf32>
      %c0_29 = arith.constant 0 : index
      %c0_30 = arith.constant 0 : index
      %c0_31 = arith.constant 0 : index
      %41 = vector.load %arg11[%c0_29, %c0_30, %c0_31] : memref<1x32x128xf32, #tpu.memory_space<vmem>>, vector<1x32x128xf32>
      tpu.vector_store %arg11[%c0_29, %c0_30, %c0_31], %40 {strides = array<i32>} : memref<1x32x128xf32, #tpu.memory_space<vmem>>, vector<1x32x128xf32>,
    } else {
    }
    %c0_3 = arith.constant 0 : index
    %c0_4 = arith.constant 0 : index
    %c0_5 = arith.constant 0 : index
    %6 = vector.load %arg11[%c0_3, %c0_4, %c0_5] : memref<1x32x128xf32, #tpu.memory_space<vmem>>, vector<1x32x128xf32>
    %7 = vector.shape_cast %6 : vector<1x32x128xf32> to vector<32x128xf32>
    %c0_6 = arith.constant 0 : index
    %c0_7 = arith.constant 0 : index
    %8 = vector.load %arg9[%c0_6, %c0_7] : memref<32x64xbf16, #tpu.memory_space<vmem>>, vector<32x64xbf16>
    %cst = arith.constant dense<0.000000e+00> : vector<32x128xf32>
    %9 = tpu.matmul %8, %2, %cst {dimension_numbers = #tpu.dot_dimension_numbers<[1], [0], [0], [1], [0, 0, 1, 1], [], []>} : vector<32x64xbf16>, vector<64x128xbf16>, vector<32x128xf32> -> vector<32x128xf32>
    %10 = arith.addf %7, %9 : vector<32x128xf32>
    %c0_8 = arith.constant 0 : index
    %c0_9 = arith.constant 0 : index
    %c0_10 = arith.constant 0 : index
    %11 = vector.load %arg11[%c0_8, %c0_9, %c0_10] : memref<1x32x128xf32, #tpu.memory_space<vmem>>, vector<1x32x128xf32>
    %12 = vector.shape_cast %11 : vector<1x32x128xf32> to vector<32x128xf32>
    %13 = vector.shape_cast %10 : vector<32x128xf32> to vector<1x32x128xf32>
    tpu.vector_store %arg11[%c0_8, %c0_9, %c0_10], %13 {strides = array<i32>} : memref<1x32x128xf32, #tpu.memory_space<vmem>>, vector<1x32x128xf32>,
    %14 = arith.index_cast %arg0 : i32 to index
    %15 = memref.load %arg2[%14] : memref<2xf32, #tpu.memory_space<smem>>
    %16 = vector.broadcast %15 : f32 to vector<64x128xf32>
    %17 = arith.mulf %1, %16 : vector<64x128xf32>
    %c0_11 = arith.constant 0 : index
    %c0_12 = arith.constant 0 : index
    %c0_13 = arith.constant 0 : index
    %18 = vector.load %arg4[%c0_11, %c0_12, %c0_13] : memref<1x1x128xf32, #tpu.memory_space<vmem>>, vector<1x1x128xf32>
    %19 = vector.shape_cast %18 : vector<1x1x128xf32> to vector<1x128xf32>
    %20 = vector.broadcast %19 : vector<1x128xf32> to vector<64x128xf32>
    %21 = arith.addf %17, %20 : vector<64x128xf32>
    %22 = arith.truncf %21 : vector<64x128xf32> to vector<64x128xbf16>
    %c0_14 = arith.constant 0 : index
    %c0_15 = arith.constant 0 : index
    %23 = vector.load %arg5[%c0_14, %c0_15] : memref<128x32xbf16, #tpu.memory_space<vmem>>, vector<128x32xbf16>
    %cst_16 = arith.constant dense<0.000000e+00> : vector<64x32xf32>
    %24 = tpu.matmul %22, %23, %cst_16 {dimension_numbers = #tpu.dot_dimension_numbers<[1], [0], [0], [1], [0, 0, 1, 1], [], []>} : vector<64x128xbf16>, vector<128x32xbf16>, vector<64x32xf32> -> vector<64x32xf32>
    %c0_17 = arith.constant 0 : index
    %c0_18 = arith.constant 0 : index
    %25 = vector.load %arg6[%c0_17, %c0_18] : memref<1x32xf32, #tpu.memory_space<vmem>>, vector<1x32xf32>
    %26 = vector.broadcast %25 : vector<1x32xf32> to vector<64x32xf32>
    %27 = arith.addf %24, %26 : vector<64x32xf32>
    %cst_19 = arith.constant 0.000000e+00 : f32
    %28 = vector.broadcast %cst_19 : f32 to vector<64x32xf32>
    %29 = arith.maximumf %27, %28 : vector<64x32xf32>
    %30 = arith.truncf %29 : vector<64x32xf32> to vector<64x32xbf16>
    %c0_20 = arith.constant 0 : index
    %c0_21 = arith.constant 0 : index
    %31 = vector.load %arg7[%c0_20, %c0_21] : memref<32x128xbf16, #tpu.memory_space<vmem>>, vector<32x128xbf16>
    %cst_22 = arith.constant dense<0.000000e+00> : vector<64x128xf32>
    %32 = tpu.matmul %30, %31, %cst_22 {dimension_numbers = #tpu.dot_dimension_numbers<[1], [0], [0], [1], [0, 0, 1, 1], [], []>} : vector<64x32xbf16>, vector<32x128xbf16>, vector<64x128xf32> -> vector<64x128xf32>
    %c0_23 = arith.constant 0 : index
    %c0_24 = arith.constant 0 : index
    %33 = vector.load %arg8[%c0_23, %c0_24] : memref<1x128xf32, #tpu.memory_space<vmem>>, vector<1x128xf32>
    %34 = vector.broadcast %33 : vector<1x128xf32> to vector<64x128xf32>
    %35 = arith.addf %32, %34 : vector<64x128xf32>
    %36 = tpu.transpose %35, [1, 0] : vector<64x128xf32> -> vector<128x64xf32>
    %c0_25 = arith.constant 0 : index
    %c0_26 = arith.constant 0 : index
    %c0_27 = arith.constant 0 : index
    %37 = vector.load %arg10[%c0_25, %c0_26, %c0_27] : memref<1x128x64xf32, #tpu.memory_space<vmem>>, vector<1x128x64xf32>
    %38 = vector.shape_cast %37 : vector<1x128x64xf32> to vector<128x64xf32>
    %39 = vector.shape_cast %36 : vector<128x64xf32> to vector<1x128x64xf32>
    tpu.vector_store %arg10[%c0_25, %c0_26, %c0_27], %39 {strides = array<i32>} : memref<1x128x64xf32, #tpu.memory_space<vmem>>, vector<1x128x64xf32>,
    return
  }
  func.func @transform_0(%arg0: i32, %arg1: i32) -> i32 {
    %c0_i32 = arith.constant 0 : i32
    %c0_i32_0 = arith.constant 0 : i32
    return %c0_i32 : i32
  }
  func.func @transform_1(%arg0: i32, %arg1: i32) -> (i32, i32, i32) {
    %c0_i32 = arith.constant 0 : i32
    %c0_i32_0 = arith.constant 0 : i32
    return %arg0, %arg1, %c0_i32 : i32, i32, i32
  }
  func.func @transform_2(%arg0: i32, %arg1: i32) -> (i32, i32, i32) {
    %c0_i32 = arith.constant 0 : i32
    %c0_i32_0 = arith.constant 0 : i32
    %c0_i32_1 = arith.constant 0 : i32
    return %arg0, %c0_i32, %c0_i32_0 : i32, i32, i32
  }
  func.func @transform_3(%arg0: i32, %arg1: i32) -> (i32, i32) {
    %c0_i32 = arith.constant 0 : i32
    %c0_i32_0 = arith.constant 0 : i32
    %c0_i32_1 = arith.constant 0 : i32
    return %c0_i32, %c0_i32_0 : i32, i32
  }
  func.func @transform_4(%arg0: i32, %arg1: i32) -> (i32, i32) {
    %c0_i32 = arith.constant 0 : i32
    %c0_i32_0 = arith.constant 0 : i32
    %c0_i32_1 = arith.constant 0 : i32
    return %c0_i32, %c0_i32_0 : i32, i32
  }
  func.func @transform_5(%arg0: i32, %arg1: i32) -> (i32, i32) {
    %c0_i32 = arith.constant 0 : i32
    %c0_i32_0 = arith.constant 0 : i32
    %c0_i32_1 = arith.constant 0 : i32
    return %c0_i32, %c0_i32_0 : i32, i32
  }
  func.func @transform_6(%arg0: i32, %arg1: i32) -> (i32, i32) {
    %c0_i32 = arith.constant 0 : i32
    %c0_i32_0 = arith.constant 0 : i32
    %c0_i32_1 = arith.constant 0 : i32
    return %c0_i32, %c0_i32_0 : i32, i32
  }
  func.func @transform_7(%arg0: i32, %arg1: i32) -> (i32, i32) {
    %c0_i32 = arith.constant 0 : i32
    %c0_i32_0 = arith.constant 0 : i32
    return %c0_i32, %arg1 : i32, i32
  }
  func.func @transform_8(%arg0: i32, %arg1: i32) -> (i32, i32, i32) {
    %c0_i32 = arith.constant 0 : i32
    %c0_i32_0 = arith.constant 0 : i32
    return %arg0, %c0_i32, %arg1 : i32, i32, i32
  }
  func.func @transform_9(%arg0: i32, %arg1: i32) -> (i32, i32, i32) {
    %c0_i32 = arith.constant 0 : i32
    %c0_i32_0 = arith.constant 0 : i32
    %c0_i32_1 = arith.constant 0 : i32
    return %arg0, %c0_i32, %c0_i32_0 : i32, i32, i32
  }
}

module attributes {stable_mosaic.version = 11 : i64} {
  func.func @_sparse_epilogue_kernel(%arg0: i32, %arg1: memref<2xi32, #tpu.memory_space<smem>>, %arg2: memref<1x32x128xf32, #tpu.memory_space<vmem>>, %arg3: memref<7x1x128xf32, #tpu.memory_space<vmem>>, %arg4: memref<7x1x128xf32, #tpu.memory_space<vmem>>, %arg5: memref<1x32x1xf32, #tpu.memory_space<vmem>>, %arg6: memref<1x32x1xf32, #tpu.memory_space<vmem>>, %arg7: memref<8x1xf32, #tpu.memory_space<vmem>>, %arg8: memref<8x32xbf16, #tpu.memory_space<vmem>>, %arg9: memref<8x128xf32, #tpu.memory_space<vmem>>, %arg10: memref<8x128xf32, #tpu.memory_space<vmem>>, %arg11: memref<1x7x8x128xf32, #tpu.memory_space<vmem>>) attributes {dimension_semantics = [#tpu.dimension_semantics<parallel>], iteration_bounds = array<i64: 2>, scalar_prefetch = 0 : i64, scratch_operands = 0 : i64, tpu.core_type = #tpu.core_type<tc>, window_params = [{transform_indices = @transform_0, window_bounds = array<i64: 2>}, {transform_indices = @transform_1, window_bounds = array<i64: 1, 32, 128>}, {pipeline_mode = #tpu.pipeline_mode<synchronous>, transform_indices = @transform_2, window_bounds = array<i64: 7, 1, 128>}, {pipeline_mode = #tpu.pipeline_mode<synchronous>, transform_indices = @transform_3, window_bounds = array<i64: 7, 1, 128>}, {pipeline_mode = #tpu.pipeline_mode<synchronous>, transform_indices = @transform_4, window_bounds = array<i64: 1, 32, 1>}, {pipeline_mode = #tpu.pipeline_mode<synchronous>, transform_indices = @transform_5, window_bounds = array<i64: 1, 32, 1>}, {pipeline_mode = #tpu.pipeline_mode<synchronous>, transform_indices = @transform_6, window_bounds = array<i64: 8, 1>}, {pipeline_mode = #tpu.pipeline_mode<synchronous>, transform_indices = @transform_7, window_bounds = array<i64: 8, 32>}, {pipeline_mode = #tpu.pipeline_mode<synchronous>, transform_indices = @transform_8, window_bounds = array<i64: 8, 128>}, {pipeline_mode = #tpu.pipeline_mode<synchronous>, transform_indices = @transform_9, window_bounds = array<i64: 8, 128>}, {transform_indices = @transform_10, window_bounds = array<i64: 1, 7, 8, 128>}]} {
    %c0 = arith.constant 0 : index
    %c0_0 = arith.constant 0 : index
    %c0_1 = arith.constant 0 : index
    %0 = vector.load %arg2[%c0, %c0_0, %c0_1] : memref<1x32x128xf32, #tpu.memory_space<vmem>>, vector<1x32x128xf32>
    %1 = vector.shape_cast %0 : vector<1x32x128xf32> to vector<32x128xf32>
    %c0_2 = arith.constant 0 : index
    %c0_3 = arith.constant 0 : index
    %c0_4 = arith.constant 0 : index
    %2 = vector.load %arg3[%c0_2, %c0_3, %c0_4] : memref<7x1x128xf32, #tpu.memory_space<vmem>>, vector<7x1x128xf32>
    %3 = vector.shape_cast %1 : vector<32x128xf32> to vector<1x32x128xf32>
    %4 = vector.broadcast %2 : vector<7x1x128xf32> to vector<7x32x128xf32>
    %5 = vector.broadcast %3 : vector<1x32x128xf32> to vector<7x32x128xf32>
    %6 = arith.mulf %4, %5 : vector<7x32x128xf32>
    %c0_5 = arith.constant 0 : index
    %c0_6 = arith.constant 0 : index
    %c0_7 = arith.constant 0 : index
    %7 = vector.load %arg5[%c0_5, %c0_6, %c0_7] : memref<1x32x1xf32, #tpu.memory_space<vmem>>, vector<1x32x1xf32>
    %c0_8 = arith.constant 0 : index
    %c0_9 = arith.constant 0 : index
    %c0_10 = arith.constant 0 : index
    %8 = vector.load %arg4[%c0_8, %c0_9, %c0_10] : memref<7x1x128xf32, #tpu.memory_space<vmem>>, vector<7x1x128xf32>
    %9 = vector.broadcast %7 : vector<1x32x1xf32> to vector<7x32x128xf32>
    %10 = vector.broadcast %8 : vector<7x1x128xf32> to vector<7x32x128xf32>
    %11 = arith.mulf %9, %10 : vector<7x32x128xf32>
    %12 = arith.addf %6, %11 : vector<7x32x128xf32>
    %c0_11 = arith.constant 0 : index
    %c0_12 = arith.constant 0 : index
    %c0_13 = arith.constant 0 : index
    %13 = vector.load %arg6[%c0_11, %c0_12, %c0_13] : memref<1x32x1xf32, #tpu.memory_space<vmem>>, vector<1x32x1xf32>
    %14 = vector.broadcast %13 : vector<1x32x1xf32> to vector<7x32x128xf32>
    %15 = arith.addf %12, %14 : vector<7x32x128xf32>
    %cst = arith.constant 0.000000e+00 : f32
    %16 = vector.broadcast %cst : f32 to vector<7x32x128xf32>
    %17 = arith.maximumf %15, %16 : vector<7x32x128xf32>
    %18 = arith.truncf %17 : vector<7x32x128xf32> to vector<7x32x128xbf16>
    %c0_14 = arith.constant 0 : index
    %c0_15 = arith.constant 0 : index
    %19 = vector.load %arg8[%c0_14, %c0_15] : memref<8x32xbf16, #tpu.memory_space<vmem>>, vector<8x32xbf16>
    %c0_16 = arith.constant 0 : index
    %c0_17 = arith.constant 0 : index
    %20 = vector.load %arg10[%c0_16, %c0_17] : memref<8x128xf32, #tpu.memory_space<vmem>>, vector<8x128xf32>
    %c0_18 = arith.constant 0 : index
    %c0_19 = arith.constant 0 : index
    %21 = vector.load %arg9[%c0_18, %c0_19] : memref<8x128xf32, #tpu.memory_space<vmem>>, vector<8x128xf32>
    %22 = arith.subf %21, %20 : vector<8x128xf32>
    %23 = arith.index_cast %arg0 : i32 to index
    %24 = memref.load %arg1[%23] : memref<2xi32, #tpu.memory_space<smem>>
    %25 = vector.extract_strided_slice %18 {offsets = [0, 0, 0], sizes = [1, 32, 128], strides = [1, 1, 1]} : vector<7x32x128xbf16> to vector<1x32x128xbf16>
    %26 = vector.shape_cast %25 : vector<1x32x128xbf16> to vector<32x128xbf16>
    %cst_20 = arith.constant dense<0.000000e+00> : vector<8x128xf32>
    %27 = tpu.matmul %19, %26, %cst_20 {dimension_numbers = #tpu.dot_dimension_numbers<[1], [0], [0], [1], [0, 0, 1, 1], [], []>} : vector<8x32xbf16>, vector<32x128xbf16>, vector<8x128xf32> -> vector<8x128xf32>
    %c0_21 = arith.constant 0 : index
    %c0_22 = arith.constant 0 : index
    %28 = vector.load %arg7[%c0_21, %c0_22] : memref<8x1xf32, #tpu.memory_space<vmem>>, vector<8x1xf32>
    %29 = vector.broadcast %28 : vector<8x1xf32> to vector<8x128xf32>
    %30 = arith.addf %27, %29 : vector<8x128xf32>
    %c0_i32 = arith.constant 0 : i32
    %31 = arith.cmpi eq, %24, %c0_i32 : i32
    %32 = arith.extui %31 : i1 to i32
    %33 = arith.sitofp %32 : i32 to f32
    %34 = arith.addf %30, %20 : vector<8x128xf32>
    %35 = vector.broadcast %33 : f32 to vector<8x128xf32>
    %36 = arith.mulf %35, %22 : vector<8x128xf32>
    %37 = arith.addf %34, %36 : vector<8x128xf32>
    %c0_23 = arith.constant 0 : index
    %c0_24 = arith.constant 0 : index
    %c0_25 = arith.constant 0 : index
    %c0_26 = arith.constant 0 : index
    %38 = vector.load %arg11[%c0_23, %c0_24, %c0_25, %c0_26] : memref<1x7x8x128xf32, #tpu.memory_space<vmem>>, vector<1x1x8x128xf32>
    %39 = vector.shape_cast %38 : vector<1x1x8x128xf32> to vector<8x128xf32>
    %40 = vector.shape_cast %37 : vector<8x128xf32> to vector<1x1x8x128xf32>
    tpu.vector_store %arg11[%c0_23, %c0_24, %c0_25, %c0_26], %40 {strides = array<i32>} : memref<1x7x8x128xf32, #tpu.memory_space<vmem>>, vector<1x1x8x128xf32>,
    %41 = vector.extract_strided_slice %18 {offsets = [1, 0, 0], sizes = [1, 32, 128], strides = [1, 1, 1]} : vector<7x32x128xbf16> to vector<1x32x128xbf16>
    %42 = vector.shape_cast %41 : vector<1x32x128xbf16> to vector<32x128xbf16>
    %cst_27 = arith.constant dense<0.000000e+00> : vector<8x128xf32>
    %43 = tpu.matmul %19, %42, %cst_27 {dimension_numbers = #tpu.dot_dimension_numbers<[1], [0], [0], [1], [0, 0, 1, 1], [], []>} : vector<8x32xbf16>, vector<32x128xbf16>, vector<8x128xf32> -> vector<8x128xf32>
    %c0_28 = arith.constant 0 : index
    %c0_29 = arith.constant 0 : index
    %44 = vector.load %arg7[%c0_28, %c0_29] : memref<8x1xf32, #tpu.memory_space<vmem>>, vector<8x1xf32>
    %45 = vector.broadcast %44 : vector<8x1xf32> to vector<8x128xf32>
    %46 = arith.addf %43, %45 : vector<8x128xf32>
    %c1_i32 = arith.constant 1 : i32
    %47 = arith.cmpi eq, %24, %c1_i32 : i32
    %48 = arith.extui %47 : i1 to i32
    %49 = arith.sitofp %48 : i32 to f32
    %50 = arith.addf %46, %20 : vector<8x128xf32>
    %51 = vector.broadcast %49 : f32 to vector<8x128xf32>
    %52 = arith.mulf %51, %22 : vector<8x128xf32>
    %53 = arith.addf %50, %52 : vector<8x128xf32>
    %c0_30 = arith.constant 0 : index
    %c1 = arith.constant 1 : index
    %c0_31 = arith.constant 0 : index
    %c0_32 = arith.constant 0 : index
    %54 = vector.load %arg11[%c0_30, %c1, %c0_31, %c0_32] : memref<1x7x8x128xf32, #tpu.memory_space<vmem>>, vector<1x1x8x128xf32>
    %55 = vector.shape_cast %54 : vector<1x1x8x128xf32> to vector<8x128xf32>
    %56 = vector.shape_cast %53 : vector<8x128xf32> to vector<1x1x8x128xf32>
    tpu.vector_store %arg11[%c0_30, %c1, %c0_31, %c0_32], %56 {strides = array<i32>} : memref<1x7x8x128xf32, #tpu.memory_space<vmem>>, vector<1x1x8x128xf32>,
    %57 = vector.extract_strided_slice %18 {offsets = [2, 0, 0], sizes = [1, 32, 128], strides = [1, 1, 1]} : vector<7x32x128xbf16> to vector<1x32x128xbf16>
    %58 = vector.shape_cast %57 : vector<1x32x128xbf16> to vector<32x128xbf16>
    %cst_33 = arith.constant dense<0.000000e+00> : vector<8x128xf32>
    %59 = tpu.matmul %19, %58, %cst_33 {dimension_numbers = #tpu.dot_dimension_numbers<[1], [0], [0], [1], [0, 0, 1, 1], [], []>} : vector<8x32xbf16>, vector<32x128xbf16>, vector<8x128xf32> -> vector<8x128xf32>
    %c0_34 = arith.constant 0 : index
    %c0_35 = arith.constant 0 : index
    %60 = vector.load %arg7[%c0_34, %c0_35] : memref<8x1xf32, #tpu.memory_space<vmem>>, vector<8x1xf32>
    %61 = vector.broadcast %60 : vector<8x1xf32> to vector<8x128xf32>
    %62 = arith.addf %59, %61 : vector<8x128xf32>
    %c2_i32 = arith.constant 2 : i32
    %63 = arith.cmpi eq, %24, %c2_i32 : i32
    %64 = arith.extui %63 : i1 to i32
    %65 = arith.sitofp %64 : i32 to f32
    %66 = arith.addf %62, %20 : vector<8x128xf32>
    %67 = vector.broadcast %65 : f32 to vector<8x128xf32>
    %68 = arith.mulf %67, %22 : vector<8x128xf32>
    %69 = arith.addf %66, %68 : vector<8x128xf32>
    %c0_36 = arith.constant 0 : index
    %c2 = arith.constant 2 : index
    %c0_37 = arith.constant 0 : index
    %c0_38 = arith.constant 0 : index
    %70 = vector.load %arg11[%c0_36, %c2, %c0_37, %c0_38] : memref<1x7x8x128xf32, #tpu.memory_space<vmem>>, vector<1x1x8x128xf32>
    %71 = vector.shape_cast %70 : vector<1x1x8x128xf32> to vector<8x128xf32>
    %72 = vector.shape_cast %69 : vector<8x128xf32> to vector<1x1x8x128xf32>
    tpu.vector_store %arg11[%c0_36, %c2, %c0_37, %c0_38], %72 {strides = array<i32>} : memref<1x7x8x128xf32, #tpu.memory_space<vmem>>, vector<1x1x8x128xf32>,
    %73 = vector.extract_strided_slice %18 {offsets = [3, 0, 0], sizes = [1, 32, 128], strides = [1, 1, 1]} : vector<7x32x128xbf16> to vector<1x32x128xbf16>
    %74 = vector.shape_cast %73 : vector<1x32x128xbf16> to vector<32x128xbf16>
    %cst_39 = arith.constant dense<0.000000e+00> : vector<8x128xf32>
    %75 = tpu.matmul %19, %74, %cst_39 {dimension_numbers = #tpu.dot_dimension_numbers<[1], [0], [0], [1], [0, 0, 1, 1], [], []>} : vector<8x32xbf16>, vector<32x128xbf16>, vector<8x128xf32> -> vector<8x128xf32>
    %c0_40 = arith.constant 0 : index
    %c0_41 = arith.constant 0 : index
    %76 = vector.load %arg7[%c0_40, %c0_41] : memref<8x1xf32, #tpu.memory_space<vmem>>, vector<8x1xf32>
    %77 = vector.broadcast %76 : vector<8x1xf32> to vector<8x128xf32>
    %78 = arith.addf %75, %77 : vector<8x128xf32>
    %c3_i32 = arith.constant 3 : i32
    %79 = arith.cmpi eq, %24, %c3_i32 : i32
    %80 = arith.extui %79 : i1 to i32
    %81 = arith.sitofp %80 : i32 to f32
    %82 = arith.addf %78, %20 : vector<8x128xf32>
    %83 = vector.broadcast %81 : f32 to vector<8x128xf32>
    %84 = arith.mulf %83, %22 : vector<8x128xf32>
    %85 = arith.addf %82, %84 : vector<8x128xf32>
    %c0_42 = arith.constant 0 : index
    %c3 = arith.constant 3 : index
    %c0_43 = arith.constant 0 : index
    %c0_44 = arith.constant 0 : index
    %86 = vector.load %arg11[%c0_42, %c3, %c0_43, %c0_44] : memref<1x7x8x128xf32, #tpu.memory_space<vmem>>, vector<1x1x8x128xf32>
    %87 = vector.shape_cast %86 : vector<1x1x8x128xf32> to vector<8x128xf32>
    %88 = vector.shape_cast %85 : vector<8x128xf32> to vector<1x1x8x128xf32>
    tpu.vector_store %arg11[%c0_42, %c3, %c0_43, %c0_44], %88 {strides = array<i32>} : memref<1x7x8x128xf32, #tpu.memory_space<vmem>>, vector<1x1x8x128xf32>,
    %89 = vector.extract_strided_slice %18 {offsets = [4, 0, 0], sizes = [1, 32, 128], strides = [1, 1, 1]} : vector<7x32x128xbf16> to vector<1x32x128xbf16>
    %90 = vector.shape_cast %89 : vector<1x32x128xbf16> to vector<32x128xbf16>
    %cst_45 = arith.constant dense<0.000000e+00> : vector<8x128xf32>
    %91 = tpu.matmul %19, %90, %cst_45 {dimension_numbers = #tpu.dot_dimension_numbers<[1], [0], [0], [1], [0, 0, 1, 1], [], []>} : vector<8x32xbf16>, vector<32x128xbf16>, vector<8x128xf32> -> vector<8x128xf32>
    %c0_46 = arith.constant 0 : index
    %c0_47 = arith.constant 0 : index
    %92 = vector.load %arg7[%c0_46, %c0_47] : memref<8x1xf32, #tpu.memory_space<vmem>>, vector<8x1xf32>
    %93 = vector.broadcast %92 : vector<8x1xf32> to vector<8x128xf32>
    %94 = arith.addf %91, %93 : vector<8x128xf32>
    %c4_i32 = arith.constant 4 : i32
    %95 = arith.cmpi eq, %24, %c4_i32 : i32
    %96 = arith.extui %95 : i1 to i32
    %97 = arith.sitofp %96 : i32 to f32
    %98 = arith.addf %94, %20 : vector<8x128xf32>
    %99 = vector.broadcast %97 : f32 to vector<8x128xf32>
    %100 = arith.mulf %99, %22 : vector<8x128xf32>
    %101 = arith.addf %98, %100 : vector<8x128xf32>
    %c0_48 = arith.constant 0 : index
    %c4 = arith.constant 4 : index
    %c0_49 = arith.constant 0 : index
    %c0_50 = arith.constant 0 : index
    %102 = vector.load %arg11[%c0_48, %c4, %c0_49, %c0_50] : memref<1x7x8x128xf32, #tpu.memory_space<vmem>>, vector<1x1x8x128xf32>
    %103 = vector.shape_cast %102 : vector<1x1x8x128xf32> to vector<8x128xf32>
    %104 = vector.shape_cast %101 : vector<8x128xf32> to vector<1x1x8x128xf32>
    tpu.vector_store %arg11[%c0_48, %c4, %c0_49, %c0_50], %104 {strides = array<i32>} : memref<1x7x8x128xf32, #tpu.memory_space<vmem>>, vector<1x1x8x128xf32>,
    %105 = vector.extract_strided_slice %18 {offsets = [5, 0, 0], sizes = [1, 32, 128], strides = [1, 1, 1]} : vector<7x32x128xbf16> to vector<1x32x128xbf16>
    %106 = vector.shape_cast %105 : vector<1x32x128xbf16> to vector<32x128xbf16>
    %cst_51 = arith.constant dense<0.000000e+00> : vector<8x128xf32>
    %107 = tpu.matmul %19, %106, %cst_51 {dimension_numbers = #tpu.dot_dimension_numbers<[1], [0], [0], [1], [0, 0, 1, 1], [], []>} : vector<8x32xbf16>, vector<32x128xbf16>, vector<8x128xf32> -> vector<8x128xf32>
    %c0_52 = arith.constant 0 : index
    %c0_53 = arith.constant 0 : index
    %108 = vector.load %arg7[%c0_52, %c0_53] : memref<8x1xf32, #tpu.memory_space<vmem>>, vector<8x1xf32>
    %109 = vector.broadcast %108 : vector<8x1xf32> to vector<8x128xf32>
    %110 = arith.addf %107, %109 : vector<8x128xf32>
    %c5_i32 = arith.constant 5 : i32
    %111 = arith.cmpi eq, %24, %c5_i32 : i32
    %112 = arith.extui %111 : i1 to i32
    %113 = arith.sitofp %112 : i32 to f32
    %114 = arith.addf %110, %20 : vector<8x128xf32>
    %115 = vector.broadcast %113 : f32 to vector<8x128xf32>
    %116 = arith.mulf %115, %22 : vector<8x128xf32>
    %117 = arith.addf %114, %116 : vector<8x128xf32>
    %c0_54 = arith.constant 0 : index
    %c5 = arith.constant 5 : index
    %c0_55 = arith.constant 0 : index
    %c0_56 = arith.constant 0 : index
    %118 = vector.load %arg11[%c0_54, %c5, %c0_55, %c0_56] : memref<1x7x8x128xf32, #tpu.memory_space<vmem>>, vector<1x1x8x128xf32>
    %119 = vector.shape_cast %118 : vector<1x1x8x128xf32> to vector<8x128xf32>
    %120 = vector.shape_cast %117 : vector<8x128xf32> to vector<1x1x8x128xf32>
    tpu.vector_store %arg11[%c0_54, %c5, %c0_55, %c0_56], %120 {strides = array<i32>} : memref<1x7x8x128xf32, #tpu.memory_space<vmem>>, vector<1x1x8x128xf32>,
    %121 = vector.extract_strided_slice %18 {offsets = [6, 0, 0], sizes = [1, 32, 128], strides = [1, 1, 1]} : vector<7x32x128xbf16> to vector<1x32x128xbf16>
    %122 = vector.shape_cast %121 : vector<1x32x128xbf16> to vector<32x128xbf16>
    %cst_57 = arith.constant dense<0.000000e+00> : vector<8x128xf32>
    %123 = tpu.matmul %19, %122, %cst_57 {dimension_numbers = #tpu.dot_dimension_numbers<[1], [0], [0], [1], [0, 0, 1, 1], [], []>} : vector<8x32xbf16>, vector<32x128xbf16>, vector<8x128xf32> -> vector<8x128xf32>
    %c0_58 = arith.constant 0 : index
    %c0_59 = arith.constant 0 : index
    %124 = vector.load %arg7[%c0_58, %c0_59] : memref<8x1xf32, #tpu.memory_space<vmem>>, vector<8x1xf32>
    %125 = vector.broadcast %124 : vector<8x1xf32> to vector<8x128xf32>
    %126 = arith.addf %123, %125 : vector<8x128xf32>
    %c6_i32 = arith.constant 6 : i32
    %127 = arith.cmpi eq, %24, %c6_i32 : i32
    %128 = arith.extui %127 : i1 to i32
    %129 = arith.sitofp %128 : i32 to f32
    %130 = arith.addf %126, %20 : vector<8x128xf32>
    %131 = vector.broadcast %129 : f32 to vector<8x128xf32>
    %132 = arith.mulf %131, %22 : vector<8x128xf32>
    %133 = arith.addf %130, %132 : vector<8x128xf32>
    %c0_60 = arith.constant 0 : index
    %c6 = arith.constant 6 : index
    %c0_61 = arith.constant 0 : index
    %c0_62 = arith.constant 0 : index
    %134 = vector.load %arg11[%c0_60, %c6, %c0_61, %c0_62] : memref<1x7x8x128xf32, #tpu.memory_space<vmem>>, vector<1x1x8x128xf32>
    %135 = vector.shape_cast %134 : vector<1x1x8x128xf32> to vector<8x128xf32>
    %136 = vector.shape_cast %133 : vector<8x128xf32> to vector<1x1x8x128xf32>
    tpu.vector_store %arg11[%c0_60, %c6, %c0_61, %c0_62], %136 {strides = array<i32>} : memref<1x7x8x128xf32, #tpu.memory_space<vmem>>, vector<1x1x8x128xf32>,
    return
  }
  func.func @transform_0(%arg0: i32) -> i32 {
    %c0_i32 = arith.constant 0 : i32
    %c0_i32_0 = arith.constant 0 : i32
    return %c0_i32 : i32
  }
  func.func @transform_1(%arg0: i32) -> (i32, i32, i32) {
    %c0_i32 = arith.constant 0 : i32
    %c0_i32_0 = arith.constant 0 : i32
    %c0_i32_1 = arith.constant 0 : i32
    return %arg0, %c0_i32, %c0_i32_0 : i32, i32, i32
  }
  func.func @transform_2(%arg0: i32) -> (i32, i32, i32) {
    %c0_i32 = arith.constant 0 : i32
    %c0_i32_0 = arith.constant 0 : i32
    %c0_i32_1 = arith.constant 0 : i32
    %c0_i32_2 = arith.constant 0 : i32
    return %c0_i32, %c0_i32_0, %c0_i32_1 : i32, i32, i32
  }
  func.func @transform_3(%arg0: i32) -> (i32, i32, i32) {
    %c0_i32 = arith.constant 0 : i32
    %c0_i32_0 = arith.constant 0 : i32
    %c0_i32_1 = arith.constant 0 : i32
    %c0_i32_2 = arith.constant 0 : i32
    return %c0_i32, %c0_i32_0, %c0_i32_1 : i32, i32, i32
  }
  func.func @transform_4(%arg0: i32) -> (i32, i32, i32) {
    %c0_i32 = arith.constant 0 : i32
    %c0_i32_0 = arith.constant 0 : i32
    %c0_i32_1 = arith.constant 0 : i32
    %c0_i32_2 = arith.constant 0 : i32
    return %c0_i32, %c0_i32_0, %c0_i32_1 : i32, i32, i32
  }
  func.func @transform_5(%arg0: i32) -> (i32, i32, i32) {
    %c0_i32 = arith.constant 0 : i32
    %c0_i32_0 = arith.constant 0 : i32
    %c0_i32_1 = arith.constant 0 : i32
    %c0_i32_2 = arith.constant 0 : i32
    return %c0_i32, %c0_i32_0, %c0_i32_1 : i32, i32, i32
  }
  func.func @transform_6(%arg0: i32) -> (i32, i32) {
    %c0_i32 = arith.constant 0 : i32
    %c0_i32_0 = arith.constant 0 : i32
    %c0_i32_1 = arith.constant 0 : i32
    return %c0_i32, %c0_i32_0 : i32, i32
  }
  func.func @transform_7(%arg0: i32) -> (i32, i32) {
    %c0_i32 = arith.constant 0 : i32
    %c0_i32_0 = arith.constant 0 : i32
    %c0_i32_1 = arith.constant 0 : i32
    return %c0_i32, %c0_i32_0 : i32, i32
  }
  func.func @transform_8(%arg0: i32) -> (i32, i32) {
    %c0_i32 = arith.constant 0 : i32
    %c0_i32_0 = arith.constant 0 : i32
    %c0_i32_1 = arith.constant 0 : i32
    return %c0_i32, %c0_i32_0 : i32, i32
  }
  func.func @transform_9(%arg0: i32) -> (i32, i32) {
    %c0_i32 = arith.constant 0 : i32
    %c0_i32_0 = arith.constant 0 : i32
    %c0_i32_1 = arith.constant 0 : i32
    return %c0_i32, %c0_i32_0 : i32, i32
  }
  func.func @transform_10(%arg0: i32) -> (i32, i32, i32, i32) {
    %c0_i32 = arith.constant 0 : i32
    %c0_i32_0 = arith.constant 0 : i32
    %c0_i32_1 = arith.constant 0 : i32
    %c0_i32_2 = arith.constant 0 : i32
    return %arg0, %c0_i32, %c0_i32_0, %c0_i32_1 : i32, i32, i32, i32
  }
}

</mosaic_0001>

<llo_original>
// kernel: prototype_prompt_encoder_forward.2
$region0: #{prototype_prompt_encoder_forward.2}
  #allocation0 [shape = 'u32[]', space=smem, size = 0x4, offset = 0x4, fixed_abs, tag = 'smem constant byte address 0x4 - core index']
  #allocation1 [shape = 'u32[144,128]{1,0:T(1,128)}', space=vmem, size = 0x12000, scoped, tag = 'internal scratch']
  %s0 = inlined_call_operand.vmem [shape: f32[2], index: 0, kind: input, shape index: {}]
  %s1 = inlined_call_operand.vmem [shape: f32[2,64,128], index: 1, kind: input, shape index: {}]
  %s2 = inlined_call_operand.vmem [shape: f32[2,1,128], index: 2, kind: input, shape index: {}]
  %s3 = inlined_call_operand.vmem [shape: bf16[128,32], index: 3, kind: input, shape index: {}]
  %s4 = inlined_call_operand.vmem [shape: f32[1,32], index: 4, kind: input, shape index: {}]
  %s5 = inlined_call_operand.vmem [shape: bf16[32,128], index: 5, kind: input, shape index: {}]
  %s6 = inlined_call_operand.vmem [shape: f32[1,128], index: 6, kind: input, shape index: {}]
  %s7 = inlined_call_operand.vmem [shape: bf16[32,64], index: 7, kind: input, shape index: {}]
  %s8 = inlined_call_operand.vmem [shape: f32[2,128,64], index: 8, kind: output, shape index: {0}]
  %s9 = inlined_call_operand.vmem [shape: f32[2,32,128], index: 9, kind: output, shape index: {1}]
  %10 = xla_tuple %s8, %s9
  %s11 = sld [smem:[#allocation0]]
  $region81: #{prototype_prompt_encoder_forward.2} parent=0
    _
  %s13 = ssub.s32 1, %s11
  %s14 = scalar_select 0, %s13, %s11
  $region1: #{prototype_prompt_encoder_forward.2} parent=0
    #allocation2 [shape = 'u8[512]{0}', space=smem, size = 0x200, scoped, tag = 'input window, operand 0, single buffered']
    #allocation3 [shape = 's32[2]{0}', space=sflag, size = 0x8, scoped, tag = 'scoped memory for prototype_prompt_encoder_forward.2']
    %15 = vsyncpa [#allocation3], 0
    loop: start=0, step=1, limit=4
    $region2: #{prototype_prompt_encoder_forward.2} parent=1 // loop_pre_header
      _
    $region3: #{prototype_prompt_encoder_forward.2} parent=1 // loop_header
      %s17 = sphi 0, %s21
      %p18 = scmp.ge.s32.totalorder %s17, 4
      %s24 = sphi 0, %s36
      %s25 = sphi 0, %s32
      %s26 = sphi 0, %s24
      %s27 = sphi 0, %s25
      %s28 = sphi 0, %s26
      %s29 = sphi 0, %s27
      %s37 = sphi 0, %s37
      %s39 = sphi 0, %s37
      %s40 = sphi 0, %s39
      %s54 = sphi 0, %s40
      %s62 = sphi 0, %s64
      %s65 = sphi 0, %s62
      %s66 = sphi 0, %s65
      %s82 = sphi 0, %s66
      %s88 = sphi 0, %s90
      %s91 = sphi 0, %s88
      %s92 = sphi 0, %s91
      %s108 = sphi 0, %s92
      %s112 = sphi 0, %s112
      %s114 = sphi 0, %s112
      %s115 = sphi 0, %s114
      %s129 = sphi 0, %s115
      %s133 = sphi 0, %s133
      %s135 = sphi 0, %s133
      %s136 = sphi 0, %s135
      %s150 = sphi 0, %s136
      %s154 = sphi 0, %s154
      %s156 = sphi 0, %s154
      %s157 = sphi 0, %s156
      %s171 = sphi 0, %s157
      %s175 = sphi 0, %s175
      %s177 = sphi 0, %s175
      %s178 = sphi 0, %s177
      %s192 = sphi 0, %s178
      %s198 = sphi 0, %s200
      %s201 = sphi 0, %s198
      %s202 = sphi 0, %s201
      %s218 = sphi 0, %s202
      %s226 = sphi 0, %s228
      %s229 = sphi 0, %s226
      %s230 = sphi 0, %s229
      %s246 = sphi 0, %s230
      %s252 = sphi 0, %s254
      %s255 = sphi 0, %s252
      %s256 = sphi 0, %s255
      %s272 = sphi 0, %s256
    $region4: #{prototype_prompt_encoder_forward.2} parent=1 // loop_header_branch
      %20 = sbr.rel (%p18) target = $region8
    $region5: #{prototype_prompt_encoder_forward.2} parent=1 // loop_body
      %s22 = ssub.s32 %s17, 1
      %s23 = ssub.s32 %s17, 2
      %s30 = sadd.s32 1, %s25
      %p31 = scmp.ge.s32.totalorder %s30, 1
      %s32 = scalar_select %p31, 0, %s30
      %s33 = sadd.s32 1, %s24
      %s34 = scalar_select %p31, %s33, %s24
      %p35 = scmp.ge.s32.totalorder %s34, 2
      %s36 = scalar_select %p35, 0, %s34
      %s38 = sadd.s32 %s37, 1
      %p41 = scmp.eq.s32.totalorder %s17, 1
      %p42 = scmp.ne.s32.totalorder %s37, %s39
      %p43 = scmp.eq.s32.totalorder %s17, 0
      %p44 = por %p42, %p43
      %p45 = scmp.ne.s32.totalorder %s37, %s39
      %p46 = scmp.eq.s32.totalorder %s22, 1
      %p47 = por %p45, %p46
      %p48 = scmp.ne.s32.totalorder %s39, %s40
      %p49 = scmp.eq.s32.totalorder %s22, 0
      %p50 = por %p48, %p49
      %p51 = scmp.ne.s32.totalorder %s39, %s40
      %p52 = scmp.eq.s32.totalorder %s23, 1
      %p53 = por %p51, %p52
      %p55 = scmp.ne.s32.totalorder %s40, %s54
      %p56 = scmp.eq.s32.totalorder %s23, 0
      %p57 = por %p55, %p56
      %s58 = ssub.s32 %s24, %s36
      %s59 = ssub.s32 %s25, %s32
      %s60 = sor.u32 %s58, %s59
      %p61 = scmp.eq.s32.totalorder %s60, 0
      %s63 = sadd.s32 %s62, 1
      %s64 = scalar_select %p61, %s62, %s63
      %p67 = pneg %p61
      %p68 = scmp.eq.s32.totalorder %s17, 1
      %p69 = por %p67, %p68
      %p70 = scmp.ne.s32.totalorder %s62, %s65
      %p71 = scmp.eq.s32.totalorder %s17, 0
      %p72 = por %p70, %p71
      %p73 = scmp.ne.s32.totalorder %s62, %s65
      %p74 = scmp.eq.s32.totalorder %s22, 1
      %p75 = por %p73, %p74
      %p76 = scmp.ne.s32.totalorder %s65, %s66
      %p77 = scmp.eq.s32.totalorder %s22, 0
      %p78 = por %p76, %p77
      %p79 = scmp.ne.s32.totalorder %s65, %s66
      %p80 = scmp.eq.s32.totalorder %s23, 1
      %p81 = por %p79, %p80
      %p83 = scmp.ne.s32.totalorder %s66, %s82
      %p84 = scmp.eq.s32.totalorder %s23, 0
      %p85 = por %p83, %p84
      %s86 = ssub.s32 %s24, %s36
      %p87 = scmp.eq.s32.totalorder %s86, 0
      %s89 = sadd.s32 %s88, 1
      %s90 = scalar_select %p87, %s88, %s89
      %p93 = pneg %p87
      %p94 = scmp.eq.s32.totalorder %s17, 1
      %p95 = por %p93, %p94
      %p96 = scmp.ne.s32.totalorder %s88, %s91
      %p97 = scmp.eq.s32.totalorder %s17, 0
      %p98 = por %p96, %p97
      %p99 = scmp.ne.s32.totalorder %s88, %s91
      %p100 = scmp.eq.s32.totalorder %s22, 1
      %p101 = por %p99, %p100
      %p102 = scmp.ne.s32.totalorder %s91, %s92
      %p103 = scmp.eq.s32.totalorder %s22, 0
      %p104 = por %p102, %p103
      %p105 = scmp.ne.s32.totalorder %s91, %s92
      %p106 = scmp.eq.s32.totalorder %s23, 1
      %p107 = por %p105, %p106
      %p109 = scmp.ne.s32.totalorder %s92, %s108
      %p110 = scmp.eq.s32.totalorder %s23, 0
      %p111 = por %p109, %p110
      %s113 = sadd.s32 %s112, 1
      %p116 = scmp.eq.s32.totalorder %s17, 1
      %p117 = scmp.ne.s32.totalorder %s112, %s114
      %p118 = scmp.eq.s32.totalorder %s17, 0
      %p119 = por %p117, %p118
      %p120 = scmp.ne.s32.totalorder %s112, %s114
      %p121 = scmp.eq.s32.totalorder %s22, 1
      %p122 = por %p120, %p121
      %p123 = scmp.ne.s32.totalorder %s114, %s115
      %p124 = scmp.eq.s32.totalorder %s22, 0
      %p125 = por %p123, %p124
      %p126 = scmp.ne.s32.totalorder %s114, %s115
      %p127 = scmp.eq.s32.totalorder %s23, 1
      %p128 = por %p126, %p127
      %p130 = scmp.ne.s32.totalorder %s115, %s129
      %p131 = scmp.eq.s32.totalorder %s23, 0
      %p132 = por %p130, %p131
      %s134 = sadd.s32 %s133, 1
      %p137 = scmp.eq.s32.totalorder %s17, 1
      %p138 = scmp.ne.s32.totalorder %s133, %s135
      %p139 = scmp.eq.s32.totalorder %s17, 0
      %p140 = por %p138, %p139
      %p141 = scmp.ne.s32.totalorder %s133, %s135
      %p142 = scmp.eq.s32.totalorder %s22, 1
      %p143 = por %p141, %p142
      %p144 = scmp.ne.s32.totalorder %s135, %s136
      %p145 = scmp.eq.s32.totalorder %s22, 0
      %p146 = por %p144, %p145
      %p147 = scmp.ne.s32.totalorder %s135, %s136
      %p148 = scmp.eq.s32.totalorder %s23, 1
      %p149 = por %p147, %p148
      %p151 = scmp.ne.s32.totalorder %s136, %s150
      %p152 = scmp.eq.s32.totalorder %s23, 0
      %p153 = por %p151, %p152
      %s155 = sadd.s32 %s154, 1
      %p158 = scmp.eq.s32.totalorder %s17, 1
      %p159 = scmp.ne.s32.totalorder %s154, %s156
      %p160 = scmp.eq.s32.totalorder %s17, 0
      %p161 = por %p159, %p160
      %p162 = scmp.ne.s32.totalorder %s154, %s156
      %p163 = scmp.eq.s32.totalorder %s22, 1
      %p164 = por %p162, %p163
      %p165 = scmp.ne.s32.totalorder %s156, %s157
      %p166 = scmp.eq.s32.totalorder %s22, 0
      %p167 = por %p165, %p166
      %p168 = scmp.ne.s32.totalorder %s156, %s157
      %p169 = scmp.eq.s32.totalorder %s23, 1
      %p170 = por %p168, %p169
      %p172 = scmp.ne.s32.totalorder %s157, %s171
      %p173 = scmp.eq.s32.totalorder %s23, 0
      %p174 = por %p172, %p173
      %s176 = sadd.s32 %s175, 1
      %p179 = scmp.eq.s32.totalorder %s17, 1
      %p180 = scmp.ne.s32.totalorder %s175, %s177
      %p181 = scmp.eq.s32.totalorder %s17, 0
      %p182 = por %p180, %p181
      %p183 = scmp.ne.s32.totalorder %s175, %s177
      %p184 = scmp.eq.s32.totalorder %s22, 1
      %p185 = por %p183, %p184
      %p186 = scmp.ne.s32.totalorder %s177, %s178
      %p187 = scmp.eq.s32.totalorder %s22, 0
      %p188 = por %p186, %p187
      %p189 = scmp.ne.s32.totalorder %s177, %s178
      %p190 = scmp.eq.s32.totalorder %s23, 1
      %p191 = por %p189, %p190
      %p193 = scmp.ne.s32.totalorder %s178, %s192
      %p194 = scmp.eq.s32.totalorder %s23, 0
      %p195 = por %p193, %p194
      %s196 = ssub.s32 %s25, %s32
      %p197 = scmp.eq.s32.totalorder %s196, 0
      %s199 = sadd.s32 %s198, 1
      %s200 = scalar_select %p197, %s198, %s199
      %p203 = pneg %p197
      %p204 = scmp.eq.s32.totalorder %s17, 1
      %p205 = por %p203, %p204
      %p206 = scmp.ne.s32.totalorder %s198, %s201
      %p207 = scmp.eq.s32.totalorder %s17, 0
      %p208 = por %p206, %p207
      %p209 = scmp.ne.s32.totalorder %s198, %s201
      %p210 = scmp.eq.s32.totalorder %s22, 1
      %p211 = por %p209, %p210
      %p212 = scmp.ne.s32.totalorder %s201, %s202
      %p213 = scmp.eq.s32.totalorder %s22, 0
      %p214 = por %p212, %p213
      %p215 = scmp.ne.s32.totalorder %s201, %s202
      %p216 = scmp.eq.s32.totalorder %s23, 1
      %p217 = por %p215, %p216
      %p219 = scmp.ne.s32.totalorder %s202, %s218
      %p220 = scmp.eq.s32.totalorder %s23, 0
      %p221 = por %p219, %p220
      %s222 = ssub.s32 %s24, %s36
      %s223 = ssub.s32 %s25, %s32
      %s224 = sor.u32 %s222, %s223
      %p225 = scmp.eq.s32.totalorder %s224, 0
      %s227 = sadd.s32 %s226, 1
      %s228 = scalar_select %p225, %s226, %s227
      %p231 = pneg %p225
      %p232 = scmp.eq.s32.totalorder %s17, 1
      %p233 = por %p231, %p232
      %p234 = scmp.ne.s32.totalorder %s226, %s229
      %p235 = scmp.eq.s32.totalorder %s17, 0
      %p236 = por %p234, %p235
      %p237 = scmp.ne.s32.totalorder %s226, %s229
      %p238 = scmp.eq.s32.totalorder %s22, 1
      %p239 = por %p237, %p238
      %p240 = scmp.ne.s32.totalorder %s229, %s230
      %p241 = scmp.eq.s32.totalorder %s22, 0
      %p242 = por %p240, %p241
      %p243 = scmp.ne.s32.totalorder %s229, %s230
      %p244 = scmp.eq.s32.totalorder %s23, 1
      %p245 = por %p243, %p244
      %p247 = scmp.ne.s32.totalorder %s230, %s246
      %p248 = scmp.eq.s32.totalorder %s23, 0
      %p249 = por %p247, %p248
      %s250 = ssub.s32 %s24, %s36
      %p251 = scmp.eq.s32.totalorder %s250, 0
      %s253 = sadd.s32 %s252, 1
      %s254 = scalar_select %p251, %s252, %s253
      %p257 = pneg %p251
      %p258 = scmp.eq.s32.totalorder %s17, 1
      %p259 = por %p257, %p258
      %p260 = scmp.ne.s32.totalorder %s252, %s255
      %p261 = scmp.eq.s32.totalorder %s17, 0
      %p262 = por %p260, %p261
      %p263 = scmp.ne.s32.totalorder %s252, %s255
      %p264 = scmp.eq.s32.totalorder %s22, 1
      %p265 = por %p263, %p264
      %p266 = scmp.ne.s32.totalorder %s255, %s256
      %p267 = scmp.eq.s32.totalorder %s22, 0
      %p268 = por %p266, %p267
      %p269 = scmp.ne.s32.totalorder %s255, %s256
      %p270 = scmp.eq.s32.totalorder %s23, 1
      %p271 = por %p269, %p270
      %p273 = scmp.ne.s32.totalorder %s256, %s272
      %p274 = scmp.eq.s32.totalorder %s23, 0
      %p275 = por %p273, %p274
      %p276 = scmp.le.s32.totalorder 1, %s17
      %p277 = scmp.lt.s32.totalorder %s17, 3
      %p278 = pnand %p276, %p277
      %p279 = pneg %p278
      // Predicated region
      $region9: #{prototype_prompt_encoder_forward.2} parent=5 // pred_check
        _
      $region10: #{prototype_prompt_encoder_forward.2} parent=5 // pred_check_branch
        %281 = sbr.rel (%p278) target = $region12
      $region11: #{prototype_prompt_encoder_forward.2} parent=5 // pred_region
        %s282 = ssub.s32 %s17, 1
        // Predicated region
        $region13: #{prototype_prompt_encoder_forward.2} parent=11 // pred_check
          %p283 = pneg %p50
        $region14: #{prototype_prompt_encoder_forward.2} parent=11 // pred_check_branch
          %285 = sbr.rel (%p283) target = $region16
        $region15: #{prototype_prompt_encoder_forward.2} parent=11 // pred_region
          %s287 = ssub.s32 16, 16
          %288 = vsyncadd [#allocation3], %s287
          %s290 = sshll.u32 %s0, 4
          %s291 = int_to_ptr.vmem [resolvable:$true] %s290
          %293 = dma.vmem_to_smem %s291, 16, [#allocation2], [#allocation3]
        $region16: #{prototype_prompt_encoder_forward.2} parent=11 // pred_fallthru
          _
        // Predicated region
        $region17: #{prototype_prompt_encoder_forward.2} parent=11 // pred_check
          %p294 = pneg %p125
        $region18: #{prototype_prompt_encoder_forward.2} parent=11 // pred_check_branch
          %296 = sbr.rel (%p294) target = $region20
        $region19: #{prototype_prompt_encoder_forward.2} parent=11 // pred_region
          _
        $region20: #{prototype_prompt_encoder_forward.2} parent=11 // pred_fallthru
          _
        // Predicated region
        $region21: #{prototype_prompt_encoder_forward.2} parent=11 // pred_check
          %p297 = pneg %p146
        $region22: #{prototype_prompt_encoder_forward.2} parent=11 // pred_check_branch
          %299 = sbr.rel (%p297) target = $region24
        $region23: #{prototype_prompt_encoder_forward.2} parent=11 // pred_region
          _
        $region24: #{prototype_prompt_encoder_forward.2} parent=11 // pred_fallthru
          _
        // Predicated region
        $region25: #{prototype_prompt_encoder_forward.2} parent=11 // pred_check
          %p300 = pneg %p167
        $region26: #{prototype_prompt_encoder_forward.2} parent=11 // pred_check_branch
          %302 = sbr.rel (%p300) target = $region28
        $region27: #{prototype_prompt_encoder_forward.2} parent=11 // pred_region
          _
        $region28: #{prototype_prompt_encoder_forward.2} parent=11 // pred_fallthru
          _
        // Predicated region
        $region29: #{prototype_prompt_encoder_forward.2} parent=11 // pred_check
          %p303 = pneg %p188
        $region30: #{prototype_prompt_encoder_forward.2} parent=11 // pred_check_branch
          %305 = sbr.rel (%p303) target = $region32
        $region31: #{prototype_prompt_encoder_forward.2} parent=11 // pred_region
          _
        $region32: #{prototype_prompt_encoder_forward.2} parent=11 // pred_fallthru
          _
        // Predicated region
        $region33: #{prototype_prompt_encoder_forward.2} parent=11 // pred_check
          %p306 = pneg %p214
        $region34: #{prototype_prompt_encoder_forward.2} parent=11 // pred_check_branch
          %308 = sbr.rel (%p306) target = $region36
        $region35: #{prototype_prompt_encoder_forward.2} parent=11 // pred_region
          %p309 = scmp.lt.s32.totalorder %s27, 0
          %s310 = scalar_select %p309, %s27, 0
          %s311 = smul.addr %s310, 4
          %s312 = scalar_lea.vmem %s7, %s311
        $region36: #{prototype_prompt_encoder_forward.2} parent=11 // pred_fallthru
          _
      $region12: #{prototype_prompt_encoder_forward.2} parent=5 // pred_fallthru
        _
      %p313 = scmp.lt.s32.totalorder %s17, 2
      // Predicated region
      $region37: #{prototype_prompt_encoder_forward.2} parent=5 // pred_check
        %p314 = pneg %p313
      $region38: #{prototype_prompt_encoder_forward.2} parent=5 // pred_check_branch
        %316 = sbr.rel (%p314) target = $region40
      $region39: #{prototype_prompt_encoder_forward.2} parent=5 // pred_region
        // Predicated region
        $region41: #{prototype_prompt_encoder_forward.2} parent=39 // pred_check
          %p317 = pneg %p72
        $region42: #{prototype_prompt_encoder_forward.2} parent=39 // pred_check_branch
          %319 = sbr.rel (%p317) target = $region44
        $region43: #{prototype_prompt_encoder_forward.2} parent=39 // pred_region
          %s320 = smul.u32 8, %s25
          %p321 = scmp.lt.s32.totalorder %s24, 1
          %s322 = scalar_select %p321, %s24, 1
          %p323 = scmp.lt.s32.totalorder %s320, 7
          %s324 = scalar_select %p323, %s320, 7
          %s325 = smul.addr %s322, 8
          %s326 = sadd.s32 %s324, %s325
          %s327 = smul.addr %s326, 8
          %s328 = scalar_lea.vmem %s1, %s327
          %s329 = smul.u32 8, %s25
        $region44: #{prototype_prompt_encoder_forward.2} parent=39 // pred_fallthru
          _
        // Predicated region
        $region45: #{prototype_prompt_encoder_forward.2} parent=39 // pred_check
          %p330 = pneg %p98
        $region46: #{prototype_prompt_encoder_forward.2} parent=39 // pred_check_branch
          %332 = sbr.rel (%p330) target = $region48
        $region47: #{prototype_prompt_encoder_forward.2} parent=39 // pred_region
          %p333 = scmp.lt.s32.totalorder %s24, 1
          %s334 = scalar_select %p333, %s24, 1
          %s335 = scalar_lea.vmem %s2, %s334
        $region48: #{prototype_prompt_encoder_forward.2} parent=39 // pred_fallthru
          _
      $region40: #{prototype_prompt_encoder_forward.2} parent=5 // pred_fallthru
        _
      %p336 = scmp.le.s32.totalorder 1, %s17
      %p337 = scmp.lt.s32.totalorder %s17, 3
      %p338 = pnand %p336, %p337
      %p339 = pneg %p338
      // Predicated region
      $region49: #{prototype_prompt_encoder_forward.2} parent=5 // pred_check
        _
      $region50: #{prototype_prompt_encoder_forward.2} parent=5 // pred_check_branch
        %341 = sbr.rel (%p338) target = $region52
      $region51: #{prototype_prompt_encoder_forward.2} parent=5 // pred_region
        %s342 = ssub.s32 %s17, 1
        // Predicated region
        $region53: #{prototype_prompt_encoder_forward.2} parent=51 // pred_check
          %p343 = pneg %p50
        $region54: #{prototype_prompt_encoder_forward.2} parent=51 // pred_check_branch
          %345 = sbr.rel (%p343) target = $region56
        $region55: #{prototype_prompt_encoder_forward.2} parent=51 // pred_region
          %346 = dma.done [#allocation3], 16
        $region56: #{prototype_prompt_encoder_forward.2} parent=51 // pred_fallthru
          _
        %347 = sfence
        %p348 = pneg %p50
        %p349 = pneg %p47
        %s350 = smul.u32 8, %s27
        %p351 = scmp.lt.s32.totalorder %s26, 1
        %s352 = scalar_select %p351, %s26, 1
        %p353 = scmp.lt.s32.totalorder %s350, 7
        %s354 = scalar_select %p353, %s350, 7
        %s355 = smul.addr %s352, 8
        %s356 = sadd.s32 %s354, %s355
        %s357 = smul.addr %s356, 8
        %s358 = scalar_lea.vmem %s1, %s357
        %p359 = pneg %p78
        %p360 = pneg %p75
        %p361 = scmp.lt.s32.totalorder %s26, 1
        %s362 = scalar_select %p361, %s26, 1
        %s363 = scalar_lea.vmem %s2, %s362
        %p364 = pneg %p104
        %p365 = pneg %p101
        %p366 = pneg %p125
        %p367 = pneg %p122
        %p368 = pneg %p146
        %p369 = pneg %p143
        %p370 = pneg %p167
        %p371 = pneg %p164
        %p372 = pneg %p188
        %p373 = pneg %p185
        %p374 = scmp.lt.s32.totalorder %s27, 0
        %s375 = scalar_select %p374, %s27, 0
        %s376 = smul.addr %s375, 4
        %s377 = scalar_lea.vmem %s7, %s376
        %p378 = pneg %p214
        %p379 = pneg %p211
        %p380 = pneg %p242
        %p381 = pneg %p239
        %p382 = scmp.lt.s32.totalorder %s26, 1
        %s383 = scalar_select %p382, %s26, 1
        %p384 = scmp.lt.s32.totalorder %s27, 0
        %s385 = scalar_select %p384, %s27, 0
        %s386 = smul.addr %s383, 16
        %s387 = sadd.s32 %s385, %s386
        %s388 = smul.addr %s387, 8
        %s389 = scalar_lea.vmem %s8, %s388
        %p390 = pneg %p268
        %p391 = pneg %p265
        %p392 = scmp.lt.s32.totalorder %s26, 1
        %s393 = scalar_select %p392, %s26, 1
        %s394 = smul.addr %s393, 4
        %s395 = smul.addr %s394, 8
        %s396 = scalar_lea.vmem %s9, %s395
        %s397 = smul.u32 8, %s27
        %p398 = scmp.lt.s32.totalorder %s26, 1
        %s399 = scalar_select %p398, %s26, 1
        %p400 = scmp.lt.s32.totalorder %s397, 7
        %s401 = scalar_select %p400, %s397, 7
        %s402 = smul.addr %s399, 8
        %s403 = sadd.s32 %s401, %s402
        %s404 = smul.addr %s403, 8
        %s405 = scalar_lea.vmem %s1, %s404
        %s406 = smul.u32 8, %s27
        %p407 = scmp.lt.s32.totalorder %s26, 1
        %s408 = scalar_select %p407, %s26, 1
        %s409 = scalar_lea.vmem %s2, %s408
        %p410 = scmp.lt.s32.totalorder %s27, 0
        %s411 = scalar_select %p410, %s27, 0
        %s412 = smul.addr %s411, 4
        %s413 = scalar_lea.vmem %s7, %s412
        %p414 = scmp.lt.s32.totalorder %s26, 1
        %s415 = scalar_select %p414, %s26, 1
        %p416 = scmp.lt.s32.totalorder %s27, 0
        %s417 = scalar_select %p416, %s27, 0
        %s418 = smul.addr %s415, 16
        %s419 = sadd.s32 %s417, %s418
        %s420 = smul.addr %s419, 8
        %s421 = scalar_lea.vmem %s8, %s420
        %p422 = scmp.lt.s32.totalorder %s26, 1
        %s423 = scalar_select %p422, %s26, 1
        %s424 = smul.addr %s423, 4
        %s425 = smul.addr %s424, 8
        %s426 = scalar_lea.vmem %s9, %s425
        %v428 = vld [vmem:[%s405] sm:$0xff]
        %v429 = vld [vmem:[%s405 + $0x8] sm:$0xff]
        %v430 = vld [vmem:[%s405 + $0x10] sm:$0xff]
        %v431 = vld [vmem:[%s405 + $0x18] sm:$0xff]
        %v432 = vld [vmem:[%s405 + $0x20] sm:$0xff]
        %v433 = vld [vmem:[%s405 + $0x28] sm:$0xff]
        %v434 = vld [vmem:[%s405 + $0x30] sm:$0xff]
        %v435 = vld [vmem:[%s405 + $0x38] sm:$0xff]
        %v436 = vpack.c.bf16 %v429, %v428
        %v437 = vpack.c.bf16 %v431, %v430
        %v438 = vpack.c.bf16 %v433, %v432
        %v439 = vpack.c.bf16 %v435, %v434
        %p440 = scmp.eq.s32.totalorder %s27, 0
        // Predicated region
        $region57: #{prototype_prompt_encoder_forward.2} parent=51 // pred_check
          %p441 = pneg %p440
        $region58: #{prototype_prompt_encoder_forward.2} parent=51 // pred_check_branch
          %443 = sbr.rel (%p441) target = $region60
        $region59: #{prototype_prompt_encoder_forward.2} parent=51 // pred_region
          %444 = vst [vmem:[%s426] sm:$0xff] 0.0
          %445 = vst [vmem:[%s426 + $0x8] sm:$0xff] 0.0
          %446 = vst [vmem:[%s426 + $0x10] sm:$0xff] 0.0
          %447 = vst [vmem:[%s426 + $0x18] sm:$0xff] 0.0
        $region60: #{prototype_prompt_encoder_forward.2} parent=51 // pred_fallthru
          _
        %v448 = vld [vmem:[%s426] sm:$0xff]
        %v449 = vld [vmem:[%s426 + $0x8] sm:$0xff]
        %v450 = vld [vmem:[%s426 + $0x10] sm:$0xff]
        %v451 = vld [vmem:[%s426 + $0x18] sm:$0xff]
        %v452 = vld [vmem:[%s413] sm:$0xf]
        %v453 = vld [vmem:[%s413 + $0x4] sm:$0xf]
        %v454 = vld [vmem:[%s413 + $0x8] sm:$0xf]
        %v455 = vld [vmem:[%s413 + $0xc] sm:$0xf]
        %v460 = vunpack.c.l.b16 %v452
        %v461 = vunpack.c.l.b16 %v453
        %v462 = vunpack.c.l.b16 %v454
        %v463 = vunpack.c.l.b16 %v455
        %v464 = vpack.c.b16 %v461, %v460
        %v465 = vpack.c.b16 %v463, %v462
        %vm466 = vcmask 523264
        %v468 = vsel %vm466, %v464, 0
        %v471 = vsel %vm466, %v465, 0
        %473 = vmatprep.subr.bf16.mxu0 0
        %474 = vmatpush1.bf16.msra.mxu0 0
        %475 = vmatprep.subr.bf16.mxu0 0
        %476 = vmatpush1.bf16.msra.mxu0 0
        %477 = vmatprep.subr.bf16.mxu0 0
        %478 = vmatpush1.bf16.msra.mxu0 0
        %479 = vmatprep.subr.bf16.mxu0 0
        %480 = vmatpush1.bf16.msra.mxu0 0
        %481 = vmatprep.subr.bf16.mxu0 0
        %482 = vmatpush1.bf16.msra.mxu0 %v439
        %483 = vmatprep.subr.bf16.mxu0 0
        %484 = vmatpush1.bf16.msra.mxu0 %v438
        %485 = vmatprep.subr.bf16.mxu0 0
        %486 = vmatpush1.bf16.msra.mxu0 %v437
        %487 = vmatprep.subr.bf16.mxu0 0
        %488 = vmatpush1.bf16.msra.mxu0 %v436
        %489 = vmatprep.subr.bf16.mxu0 0
        %490 = vmatpush2.bf16.msra.mxu0 0
        %491 = vmatprep.subr.bf16.mxu0 0
        %492 = vmatpush2.bf16.msra.mxu0 0
        %493 = vmatprep.subr.bf16.mxu0 0
        %494 = vmatpush2.bf16.msra.mxu0 0
        %495 = vmatprep.subr.bf16.mxu0 0
        %496 = vmatpush2.bf16.msra.mxu0 0
        %497 = vmatprep.subr.bf16.mxu0 0
        %498 = vmatpush2.bf16.msra.mxu0 0
        %499 = vmatprep.subr.bf16.mxu0 0
        %500 = vmatpush2.bf16.msra.mxu0 0
        %501 = vmatprep.subr.bf16.mxu0 0
        %502 = vmatpush2.bf16.msra.mxu0 0
        %503 = vmatprep.subr.bf16.mxu0 0
        %504 = vmatpush2.bf16.msra.mxu0 0
        %505 = vmatprep.mubr.bf16.mxu0 0
        %506 = vmatmul.mubr.bf16.gmra.mxu0 %v468
        %v507 = vpop.f32.mrf.mxu0
        %v508 = vadd.f32 0.0, %v507
        %v509 = vpop.f32.mrf.mxu0
        %v510 = vpop.f32.mrf.mxu0
        %v511 = vadd.f32 0.0, %v510
        %v512 = vpop.f32.mrf.mxu0
        %513 = vmatprep.mubr.bf16.mxu0 0
        %514 = vmatmul.mubr.bf16.gmra.mxu0 %v471
        %v515 = vpop.f32.mrf.mxu0
        %v516 = vadd.f32 0.0, %v515
        %v517 = vpop.f32.mrf.mxu0
        %v518 = vpop.f32.mrf.mxu0
        %v519 = vadd.f32 0.0, %v518
        %v520 = vpop.f32.mrf.mxu0
        %521 = vdwg.mxu0
        %v522 = vadd.f32 %v448, %v508
        %v523 = vadd.f32 %v449, %v511
        %v524 = vadd.f32 %v450, %v516
        %v525 = vadd.f32 %v451, %v519
        %526 = vst [vmem:[%s426] sm:$0xff] %v522
        %527 = vst [vmem:[%s426 + $0x8] sm:$0xff] %v523
        %528 = vst [vmem:[%s426 + $0x10] sm:$0xff] %v524
        %529 = vst [vmem:[%s426 + $0x18] sm:$0xff] %v525
        %s530 = sld [smem:[#allocation2 + %s26]]
        %v531 = vstv %s530
        %v532 = vmul.f32 %v428, %v531
        %v533 = vmul.f32 %v429, %v531
        %v534 = vmul.f32 %v430, %v531
        %v535 = vmul.f32 %v431, %v531
        %v536 = vmul.f32 %v432, %v531
        %v537 = vmul.f32 %v433, %v531
        %v538 = vmul.f32 %v434, %v531
        %v539 = vmul.f32 %v435, %v531
        %v540 = vld [vmem:[%s409] sm:$0x1]
        %v542 = vlaneseq
        %v543 = vshrl.u32 %v542, 7
        %v544 = vsub.s32 0, %v543
        %v545 = vrot.slane %v540, %v544
        %v547 = vadd.f32 %v532, %v545
        %v548 = vadd.f32 %v533, %v545
        %v549 = vadd.f32 %v534, %v545
        %v550 = vadd.f32 %v535, %v545
        %v551 = vadd.f32 %v536, %v545
        %v552 = vadd.f32 %v537, %v545
        %v553 = vadd.f32 %v538, %v545
        %v554 = vadd.f32 %v539, %v545
        %v555 = vpack.c.bf16 %v548, %v547
        %v556 = vpack.c.bf16 %v550, %v549
        %v557 = vpack.c.bf16 %v552, %v551
        %v558 = vpack.c.bf16 %v554, %v553
        %v559 = vld [vmem:[%s3] sm:$0xf]
        %v560 = vld [vmem:[%s3 + $0x4] sm:$0xf]
        %v561 = vld [vmem:[%s3 + $0x8] sm:$0xf]
        %v562 = vld [vmem:[%s3 + $0xc] sm:$0xf]
        %v563 = vld [vmem:[%s3 + $0x10] sm:$0xf]
        %v564 = vld [vmem:[%s3 + $0x14] sm:$0xf]
        %v565 = vld [vmem:[%s3 + $0x18] sm:$0xf]
        %v566 = vld [vmem:[%s3 + $0x1c] sm:$0xf]
        %v567 = vld [vmem:[%s3 + $0x20] sm:$0xf]
        %v568 = vld [vmem:[%s3 + $0x24] sm:$0xf]
        %v569 = vld [vmem:[%s3 + $0x28] sm:$0xf]
        %v570 = vld [vmem:[%s3 + $0x2c] sm:$0xf]
        %v571 = vld [vmem:[%s3 + $0x30] sm:$0xf]
        %v572 = vld [vmem:[%s3 + $0x34] sm:$0xf]
        %v573 = vld [vmem:[%s3 + $0x38] sm:$0xf]
        %v574 = vld [vmem:[%s3 + $0x3c] sm:$0xf]
        %v575 = vld [vmem:[%s4] sm:$0x1]
        %v577 = vlaneseq
        %v578 = vshrl.u32 %v577, 7
        %v579 = vsub.s32 0, %v578
        %v580 = vrot.slane %v575, %v579
        %v598 = vunpack.c.l.b16 %v559
        %v599 = vunpack.c.l.b16 %v560
        %v600 = vunpack.c.l.b16 %v561
        %v601 = vunpack.c.l.b16 %v562
        %v602 = vunpack.c.l.b16 %v563
        %v603 = vunpack.c.l.b16 %v564
        %v604 = vunpack.c.l.b16 %v565
        %v605 = vunpack.c.l.b16 %v566
        %v606 = vunpack.c.l.b16 %v567
        %v607 = vunpack.c.l.b16 %v568
        %v608 = vunpack.c.l.b16 %v569
        %v609 = vunpack.c.l.b16 %v570
        %v610 = vunpack.c.l.b16 %v571
        %v611 = vunpack.c.l.b16 %v572
        %v612 = vunpack.c.l.b16 %v573
        %v613 = vunpack.c.l.b16 %v574
        %v614 = vpack.c.b16 %v599, %v598
        %v615 = vpack.c.b16 %v601, %v600
        %v616 = vpack.c.b16 %v603, %v602
        %v617 = vpack.c.b16 %v605, %v604
        %v618 = vpack.c.b16 %v607, %v606
        %v619 = vpack.c.b16 %v609, %v608
        %v620 = vpack.c.b16 %v611, %v610
        %v621 = vpack.c.b16 %v613, %v612
        %630 = vmatprep.subr.bf16.mxu0 0
        %631 = vmatpush1.bf16.msra.mxu0 %v621
        %632 = vmatprep.subr.bf16.mxu0 0
        %633 = vmatpush1.bf16.msra.mxu0 %v620
        %634 = vmatprep.subr.bf16.mxu0 0
        %635 = vmatpush1.bf16.msra.mxu0 %v619
        %636 = vmatprep.subr.bf16.mxu0 0
        %637 = vmatpush1.bf16.msra.mxu0 %v618
        %638 = vmatprep.subr.bf16.mxu0 0
        %639 = vmatpush1.bf16.msra.mxu0 %v617
        %640 = vmatprep.subr.bf16.mxu0 0
        %641 = vmatpush1.bf16.msra.mxu0 %v616
        %642 = vmatprep.subr.bf16.mxu0 0
        %643 = vmatpush1.bf16.msra.mxu0 %v615
        %644 = vmatprep.subr.bf16.mxu0 0
        %645 = vmatpush1.bf16.msra.mxu0 %v614
        %646 = vmatprep.subr.bf16.mxu0 0
        %647 = vmatpush2.bf16.msra.mxu0 0
        %648 = vmatprep.subr.bf16.mxu0 0
        %649 = vmatpush2.bf16.msra.mxu0 0
        %650 = vmatprep.subr.bf16.mxu0 0
        %651 = vmatpush2.bf16.msra.mxu0 0
        %652 = vmatprep.subr.bf16.mxu0 0
        %653 = vmatpush2.bf16.msra.mxu0 0
        %654 = vmatprep.subr.bf16.mxu0 0
        %655 = vmatpush2.bf16.msra.mxu0 0
        %656 = vmatprep.subr.bf16.mxu0 0
        %657 = vmatpush2.bf16.msra.mxu0 0
        %658 = vmatprep.subr.bf16.mxu0 0
        %659 = vmatpush2.bf16.msra.mxu0 0
        %660 = vmatprep.subr.bf16.mxu0 0
        %661 = vmatpush2.bf16.msra.mxu0 0
        %662 = vmatprep.mubr.bf16.mxu0 0
        %663 = vmatmul.mubr.bf16.gmra.mxu0 %v555
        %v664 = vpop.f32.mrf.mxu0
        %v665 = vadd.f32 %v580, %v664
        %v666 = vpop.f32.mrf.mxu0
        %v667 = vpop.f32.mrf.mxu0
        %v668 = vadd.f32 %v580, %v667
        %v669 = vpop.f32.mrf.mxu0
        %670 = vmatprep.mubr.bf16.mxu0 0
        %671 = vmatmul.mubr.bf16.gmra.mxu0 %v556
        %v672 = vpop.f32.mrf.mxu0
        %v673 = vadd.f32 %v580, %v672
        %v674 = vpop.f32.mrf.mxu0
        %v675 = vpop.f32.mrf.mxu0
        %v676 = vadd.f32 %v580, %v675
        %v677 = vpop.f32.mrf.mxu0
        %678 = vmatprep.mubr.bf16.mxu0 0
        %679 = vmatmul.mubr.bf16.gmra.mxu0 %v557
        %v680 = vpop.f32.mrf.mxu0
        %v681 = vadd.f32 %v580, %v680
        %v682 = vpop.f32.mrf.mxu0
        %v683 = vpop.f32.mrf.mxu0
        %v684 = vadd.f32 %v580, %v683
        %v685 = vpop.f32.mrf.mxu0
        %686 = vmatprep.mubr.bf16.mxu0 0
        %687 = vmatmul.mubr.bf16.gmra.mxu0 %v558
        %v688 = vpop.f32.mrf.mxu0
        %v689 = vadd.f32 %v580, %v688
        %v690 = vpop.f32.mrf.mxu0
        %v691 = vpop.f32.mrf.mxu0
        %v692 = vadd.f32 %v580, %v691
        %v693 = vpop.f32.mrf.mxu0
        %694 = vdwg.mxu0
        %v695 = vmax.f32 %v665, 0.0
        %v696 = vmax.f32 %v668, 0.0
        %v697 = vmax.f32 %v673, 0.0
        %v698 = vmax.f32 %v676, 0.0
        %v699 = vmax.f32 %v681, 0.0
        %v700 = vmax.f32 %v684, 0.0
        %v701 = vmax.f32 %v689, 0.0
        %v702 = vmax.f32 %v692, 0.0
        %v703 = vpack.c.bf16 %v696, %v695
        %v704 = vpack.c.bf16 %v698, %v697
        %v705 = vpack.c.bf16 %v700, %v699
        %v706 = vpack.c.bf16 %v702, %v701
        %v707 = vld [vmem:[%s5] sm:$0xf]
        %v708 = vld [vmem:[%s5 + $0x4] sm:$0xf]
        %v709 = vld [vmem:[%s5 + $0x8] sm:$0xf]
        %v710 = vld [vmem:[%s5 + $0xc] sm:$0xf]
        %v711 = vld [vmem:[%s6] sm:$0x1]
        %v713 = vlaneseq
        %v714 = vshrl.u32 %v713, 7
        %v715 = vsub.s32 0, %v714
        %v716 = vrot.slane %v711, %v715
        %v722 = vunpack.c.l.b16 %v707
        %v723 = vunpack.c.l.b16 %v708
        %v724 = vunpack.c.l.b16 %v709
        %v725 = vunpack.c.l.b16 %v710
        %v726 = vpack.c.b16 %v723, %v722
        %v727 = vpack.c.b16 %v725, %v724
        %vm730 = vcmask 261120
        %v732 = vsel %vm730, %v703, 0
        %v735 = vsel %vm730, %v704, 0
        %v738 = vsel %vm730, %v705, 0
        %v741 = vsel %vm730, %v706, 0
        %743 = vmatprep.subr.bf16.mxu0 0
        %744 = vmatpush1.bf16.msra.mxu0 0
        %745 = vmatprep.subr.bf16.mxu0 0
        %746 = vmatpush1.bf16.msra.mxu0 0
        %747 = vmatprep.subr.bf16.mxu0 0
        %748 = vmatpush1.bf16.msra.mxu0 0
        %749 = vmatprep.subr.bf16.mxu0 0
        %750 = vmatpush1.bf16.msra.mxu0 0
        %751 = vmatprep.subr.bf16.mxu0 0
        %752 = vmatpush1.bf16.msra.mxu0 0
        %753 = vmatprep.subr.bf16.mxu0 0
        %754 = vmatpush1.bf16.msra.mxu0 0
        %755 = vmatprep.subr.bf16.mxu0 0
        %756 = vmatpush1.bf16.msra.mxu0 %v727
        %757 = vmatprep.subr.bf16.mxu0 0
        %758 = vmatpush1.bf16.msra.mxu0 %v726
        %759 = vmatprep.subr.bf16.mxu0 0
        %760 = vmatpush2.bf16.msra.mxu0 0
        %761 = vmatprep.subr.bf16.mxu0 0
        %762 = vmatpush2.bf16.msra.mxu0 0
        %763 = vmatprep.subr.bf16.mxu0 0
        %764 = vmatpush2.bf16.msra.mxu0 0
        %765 = vmatprep.subr.bf16.mxu0 0
        %766 = vmatpush2.bf16.msra.mxu0 0
        %767 = vmatprep.subr.bf16.mxu0 0
        %768 = vmatpush2.bf16.msra.mxu0 0
        %769 = vmatprep.subr.bf16.mxu0 0
        %770 = vmatpush2.bf16.msra.mxu0 0
        %771 = vmatprep.subr.bf16.mxu0 0
        %772 = vmatpush2.bf16.msra.mxu0 0
        %773 = vmatprep.subr.bf16.mxu0 0
        %774 = vmatpush2.bf16.msra.mxu0 0
        %775 = vmatprep.mubr.bf16.mxu0 0
        %776 = vmatmul.mubr.bf16.gmra.mxu0 %v732
        %v777 = vpop.f32.mrf.mxu0
        %v778 = vadd.f32 %v716, %v777
        %v779 = vpop.f32.mrf.mxu0
        %v780 = vpop.f32.mrf.mxu0
        %v781 = vadd.f32 %v716, %v780
        %v782 = vpop.f32.mrf.mxu0
        %783 = vmatprep.mubr.bf16.mxu0 0
        %784 = vmatmul.mubr.bf16.gmra.mxu0 %v735
        %v785 = vpop.f32.mrf.mxu0
        %v786 = vadd.f32 %v716, %v785
        %v787 = vpop.f32.mrf.mxu0
        %v788 = vpop.f32.mrf.mxu0
        %v789 = vadd.f32 %v716, %v788
        %v790 = vpop.f32.mrf.mxu0
        %791 = vmatprep.mubr.bf16.mxu0 0
        %792 = vmatmul.mubr.bf16.gmra.mxu0 %v738
        %v793 = vpop.f32.mrf.mxu0
        %v794 = vadd.f32 %v716, %v793
        %v795 = vpop.f32.mrf.mxu0
        %v796 = vpop.f32.mrf.mxu0
        %v797 = vadd.f32 %v716, %v796
        %v798 = vpop.f32.mrf.mxu0
        %799 = vmatprep.mubr.bf16.mxu0 0
        %800 = vmatmul.mubr.bf16.gmra.mxu0 %v741
        %v801 = vpop.f32.mrf.mxu0
        %v802 = vadd.f32 %v716, %v801
        %v803 = vpop.f32.mrf.mxu0
        %v804 = vpop.f32.mrf.mxu0
        %v805 = vadd.f32 %v716, %v804
        %v806 = vpop.f32.mrf.mxu0
        %807 = vdwg.mxu0
        %808 = vxpose.xlu0.b32.start [1/16] %v778, 128
        %809 = vxpose.xlu0.b32.cont [2/16] %v781, 128
        %810 = vxpose.xlu0.b32.cont [3/16] %v786, 128
        %811 = vxpose.xlu0.b32.cont [4/16] %v789, 128
        %812 = vxpose.xlu0.b32.cont [5/16] %v794, 128
        %813 = vxpose.xlu0.b32.cont [6/16] %v797, 128
        %814 = vxpose.xlu0.b32.cont [7/16] %v802, 128
        %815 = vxpose.xlu0.b32.cont [8/16] %v805, 128
        %816 = vxpose.xlu0.b32.cont [9/16] 0.0, 128
        %817 = vxpose.xlu0.b32.cont [10/16] 0.0, 128
        %818 = vxpose.xlu0.b32.cont [11/16] 0.0, 128
        %819 = vxpose.xlu0.b32.cont [12/16] 0.0, 128
        %820 = vxpose.xlu0.b32.cont [13/16] 0.0, 128
        %821 = vxpose.xlu0.b32.cont [14/16] 0.0, 128
        %822 = vxpose.xlu0.b32.cont [15/16] 0.0, 128
        %823 = vxpose.xlu0.b32.end [16/16] 0.0, 128
        %v824 = vpop.trf.xlu0
        %v825 = vpop.trf.xlu0
        %v826 = vpop.trf.xlu0
        %v827 = vpop.trf.xlu0
        %v828 = vpop.trf.xlu0
        %v829 = vpop.trf.xlu0
        %v830 = vpop.trf.xlu0
        %v831 = vpop.trf.xlu0
        %v832 = vpop.trf.xlu0
        %v833 = vpop.trf.xlu0
        %v834 = vpop.trf.xlu0
        %v835 = vpop.trf.xlu0
        %v836 = vpop.trf.xlu0
        %v837 = vpop.trf.xlu0
        %v838 = vpop.trf.xlu0
        %v839 = vpop.trf.xlu0
        %840 = vst.msk [vmem:[%s421] sm:$0xff] %vm466, %v824
        %841 = vst.msk [vmem:[%s421 + $0x8] sm:$0xff] %vm466, %v825
        %842 = vst.msk [vmem:[%s421 + $0x10] sm:$0xff] %vm466, %v826
        %843 = vst.msk [vmem:[%s421 + $0x18] sm:$0xff] %vm466, %v827
        %844 = vst.msk [vmem:[%s421 + $0x20] sm:$0xff] %vm466, %v828
        %845 = vst.msk [vmem:[%s421 + $0x28] sm:$0xff] %vm466, %v829
        %846 = vst.msk [vmem:[%s421 + $0x30] sm:$0xff] %vm466, %v830
        %847 = vst.msk [vmem:[%s421 + $0x38] sm:$0xff] %vm466, %v831
        %848 = vst.msk [vmem:[%s421 + $0x40] sm:$0xff] %vm466, %v832
        %849 = vst.msk [vmem:[%s421 + $0x48] sm:$0xff] %vm466, %v833
        %850 = vst.msk [vmem:[%s421 + $0x50] sm:$0xff] %vm466, %v834
        %851 = vst.msk [vmem:[%s421 + $0x58] sm:$0xff] %vm466, %v835
        %852 = vst.msk [vmem:[%s421 + $0x60] sm:$0xff] %vm466, %v836
        %853 = vst.msk [vmem:[%s421 + $0x68] sm:$0xff] %vm466, %v837
        %854 = vst.msk [vmem:[%s421 + $0x70] sm:$0xff] %vm466, %v838
        %855 = vst.msk [vmem:[%s421 + $0x78] sm:$0xff] %vm466, %v839
        %p856 = scmp.lt.s32.totalorder %s26, 1
        %s857 = scalar_select %p856, %s26, 1
        %p858 = scmp.lt.s32.totalorder %s27, 0
        %s859 = scalar_select %p858, %s27, 0
        %s860 = smul.addr %s857, 16
        %s861 = sadd.s32 %s859, %s860
        %s862 = smul.addr %s861, 8
        %s863 = scalar_lea.vmem %s8, %s862
        %p864 = scmp.lt.s32.totalorder %s26, 1
        %s865 = scalar_select %p864, %s26, 1
        %s866 = smul.addr %s865, 4
        %s867 = smul.addr %s866, 8
        %s868 = scalar_lea.vmem %s9, %s867
        // Predicated region
        $region61: #{prototype_prompt_encoder_forward.2} parent=51 // pred_check
          %p869 = pneg %p239
        $region62: #{prototype_prompt_encoder_forward.2} parent=51 // pred_check_branch
          %871 = sbr.rel (%p869) target = $region64
        $region63: #{prototype_prompt_encoder_forward.2} parent=51 // pred_region
          _
        $region64: #{prototype_prompt_encoder_forward.2} parent=51 // pred_fallthru
          _
        // Predicated region
        $region65: #{prototype_prompt_encoder_forward.2} parent=51 // pred_check
          %p872 = pneg %p265
        $region66: #{prototype_prompt_encoder_forward.2} parent=51 // pred_check_branch
          %874 = sbr.rel (%p872) target = $region68
        $region67: #{prototype_prompt_encoder_forward.2} parent=51 // pred_region
          _
        $region68: #{prototype_prompt_encoder_forward.2} parent=51 // pred_fallthru
          _
      $region52: #{prototype_prompt_encoder_forward.2} parent=5 // pred_fallthru
        _
      %p875 = scmp.le.s32.totalorder 2, %s17
      // Predicated region
      $region69: #{prototype_prompt_encoder_forward.2} parent=5 // pred_check
        %p876 = pneg %p875
      $region70: #{prototype_prompt_encoder_forward.2} parent=5 // pred_check_branch
        %878 = sbr.rel (%p876) target = $region72
      $region71: #{prototype_prompt_encoder_forward.2} parent=5 // pred_region
        %s879 = ssub.s32 %s17, 2
        // Predicated region
        $region73: #{prototype_prompt_encoder_forward.2} parent=71 // pred_check
          %p880 = pneg %p245
        $region74: #{prototype_prompt_encoder_forward.2} parent=71 // pred_check_branch
          %882 = sbr.rel (%p880) target = $region76
        $region75: #{prototype_prompt_encoder_forward.2} parent=71 // pred_region
          %p883 = scmp.lt.s32.totalorder %s28, 1
          %s884 = scalar_select %p883, %s28, 1
          %p885 = scmp.lt.s32.totalorder %s29, 0
          %s886 = scalar_select %p885, %s29, 0
          %s887 = smul.addr %s884, 16
          %s888 = sadd.s32 %s886, %s887
          %s889 = smul.addr %s888, 8
          %s890 = scalar_lea.vmem %s8, %s889
        $region76: #{prototype_prompt_encoder_forward.2} parent=71 // pred_fallthru
          _
        // Predicated region
        $region77: #{prototype_prompt_encoder_forward.2} parent=71 // pred_check
          %p891 = pneg %p271
        $region78: #{prototype_prompt_encoder_forward.2} parent=71 // pred_check_branch
          %893 = sbr.rel (%p891) target = $region80
        $region79: #{prototype_prompt_encoder_forward.2} parent=71 // pred_region
          %p894 = scmp.lt.s32.totalorder %s28, 1
          %s895 = scalar_select %p894, %s28, 1
          %s896 = smul.addr %s895, 4
          %s897 = smul.addr %s896, 8
          %s898 = scalar_lea.vmem %s9, %s897
        $region80: #{prototype_prompt_encoder_forward.2} parent=71 // pred_fallthru
          _
      $region72: #{prototype_prompt_encoder_forward.2} parent=5 // pred_fallthru
        _
    $region6: #{prototype_prompt_encoder_forward.2} parent=1 // loop_footer
      %s21 = sadd.s32 1, %s17
    $region7: #{prototype_prompt_encoder_forward.2} parent=1 // loop_footer_branch
      %16 = sbr.rel target = $region3
    $region8: #{prototype_prompt_encoder_forward.2} parent=1 // loop_exit
      _
    %899 = vsyncpa [#allocation3], 1
    %s900 = scalar_lea.sflag [#allocation3], 1
    %901 = vsyncpa %s900, 1

// kernel: prototype_prompt_encoder_forward.3
$region0: #{prototype_prompt_encoder_forward.3}
  #allocation0 [shape = 'u32[]', space=smem, size = 0x4, offset = 0x4, fixed_abs, tag = 'smem constant byte address 0x4 - core index']
  #allocation1 [shape = 'u32[144,128]{1,0:T(1,128)}', space=vmem, size = 0x12000, scoped, tag = 'internal scratch']
  %s0 = inlined_call_operand.vmem [shape: s32[2], index: 0, kind: input, shape index: {}]
  %s1 = inlined_call_operand.vmem [shape: f32[2,32,128], index: 1, kind: input, shape index: {}]
  %s2 = inlined_call_operand.vmem [shape: f32[7,1,128], index: 2, kind: input, shape index: {}]
  %s3 = inlined_call_operand.vmem [shape: f32[7,1,128], index: 3, kind: input, shape index: {}]
  %s4 = inlined_call_operand.vmem [shape: f32[1,32,1], index: 4, kind: input, shape index: {}]
  %s5 = inlined_call_operand.vmem [shape: f32[1,32,1], index: 5, kind: input, shape index: {}]
  %s6 = inlined_call_operand.vmem [shape: f32[8,1], index: 6, kind: input, shape index: {}]
  %s7 = inlined_call_operand.vmem [shape: bf16[8,32], index: 7, kind: input, shape index: {}]
  %s8 = inlined_call_operand.vmem [shape: f32[8,128], index: 8, kind: input, shape index: {}]
  %s9 = inlined_call_operand.vmem [shape: f32[8,128], index: 9, kind: input, shape index: {}]
  %s10 = inlined_call_operand.hbm [shape: f32[2,7,8,128], index: 10, kind: output, shape index: {}]
  %s11 = sld [smem:[#allocation0]]
  $region77: #{prototype_prompt_encoder_forward.3} parent=0
    _
  %s13 = ssub.s32 1, %s11
  %s14 = scalar_select 0, %s13, %s11
  $region1: #{prototype_prompt_encoder_forward.3} parent=0
    #allocation2 [shape = 'u8[512]{0}', space=smem, size = 0x200, scoped, tag = 'input window, operand 0, single buffered']
    #allocation3 [shape = 's32[2]{0}', space=sflag, size = 0x8, scoped, tag = 'scoped memory for prototype_prompt_encoder_forward.3']
    #allocation4 [shape = 's32[2]{0}', space=sflag, size = 0x8, scoped, tag = 'scoped memory for prototype_prompt_encoder_forward.3']
    #allocation5 [shape = 'u8[57344]{0}', space=vmem, size = 0xe000, scoped, tag = 'output window, operand 0']
    %15 = vsyncpa [#allocation4], 0
    %16 = vsyncpa [#allocation3], 0
    %s17 = scalar_lea.sflag [#allocation3], 1
    %18 = vsyncpa %s17, 0
    loop: start=0, step=1, limit=4
    $region2: #{prototype_prompt_encoder_forward.3} parent=1 // loop_pre_header
      _
    $region3: #{prototype_prompt_encoder_forward.3} parent=1 // loop_header
      %s20 = sphi 0, %s24
      %p21 = scmp.ge.s32.totalorder %s20, 4
      %s28 = sphi 0, %s28
      %s30 = sphi 0, %s28
      %s31 = sphi 0, %s30
      %s45 = sphi 0, %s31
      %s51 = sphi 0, %s53
      %s54 = sphi 0, %s51
      %s55 = sphi 0, %s54
      %s71 = sphi 0, %s55
      %s75 = sphi 0, %s75
      %s77 = sphi 0, %s75
      %s78 = sphi 0, %s77
      %s92 = sphi 0, %s78
      %s96 = sphi 0, %s96
      %s98 = sphi 0, %s96
      %s99 = sphi 0, %s98
      %s113 = sphi 0, %s99
      %s117 = sphi 0, %s117
      %s119 = sphi 0, %s117
      %s120 = sphi 0, %s119
      %s134 = sphi 0, %s120
      %s138 = sphi 0, %s138
      %s140 = sphi 0, %s138
      %s141 = sphi 0, %s140
      %s155 = sphi 0, %s141
      %s159 = sphi 0, %s159
      %s161 = sphi 0, %s159
      %s162 = sphi 0, %s161
      %s176 = sphi 0, %s162
      %s180 = sphi 0, %s180
      %s182 = sphi 0, %s180
      %s183 = sphi 0, %s182
      %s197 = sphi 0, %s183
      %s201 = sphi 0, %s201
      %s203 = sphi 0, %s201
      %s204 = sphi 0, %s203
      %s218 = sphi 0, %s204
      %s222 = sphi 0, %s222
      %s224 = sphi 0, %s222
      %s225 = sphi 0, %s224
      %s239 = sphi 0, %s225
      %s245 = sphi 0, %s247
      %s248 = sphi 0, %s245
      %s249 = sphi 0, %s248
      %s265 = sphi 0, %s249
    $region4: #{prototype_prompt_encoder_forward.3} parent=1 // loop_header_branch
      %23 = sbr.rel (%p21) target = $region8
    $region5: #{prototype_prompt_encoder_forward.3} parent=1 // loop_body
      %s25 = ssub.s32 %s20, 1
      %s26 = ssub.s32 %s20, 2
      %s27 = sadd.s32 %s20, 1
      %s29 = sadd.s32 %s28, 1
      %p32 = scmp.eq.s32.totalorder %s20, 1
      %p33 = scmp.ne.s32.totalorder %s28, %s30
      %p34 = scmp.eq.s32.totalorder %s20, 0
      %p35 = por %p33, %p34
      %p36 = scmp.ne.s32.totalorder %s28, %s30
      %p37 = scmp.eq.s32.totalorder %s25, 1
      %p38 = por %p36, %p37
      %p39 = scmp.ne.s32.totalorder %s30, %s31
      %p40 = scmp.eq.s32.totalorder %s25, 0
      %p41 = por %p39, %p40
      %p42 = scmp.ne.s32.totalorder %s30, %s31
      %p43 = scmp.eq.s32.totalorder %s26, 1
      %p44 = por %p42, %p43
      %p46 = scmp.ne.s32.totalorder %s31, %s45
      %p47 = scmp.eq.s32.totalorder %s26, 0
      %p48 = por %p46, %p47
      %s49 = ssub.s32 %s20, %s27
      %p50 = scmp.eq.s32.totalorder %s49, 0
      %s52 = sadd.s32 %s51, 1
      %s53 = scalar_select %p50, %s51, %s52
      %p56 = pneg %p50
      %p57 = scmp.eq.s32.totalorder %s20, 1
      %p58 = por %p56, %p57
      %p59 = scmp.ne.s32.totalorder %s51, %s54
      %p60 = scmp.eq.s32.totalorder %s20, 0
      %p61 = por %p59, %p60
      %p62 = scmp.ne.s32.totalorder %s51, %s54
      %p63 = scmp.eq.s32.totalorder %s25, 1
      %p64 = por %p62, %p63
      %p65 = scmp.ne.s32.totalorder %s54, %s55
      %p66 = scmp.eq.s32.totalorder %s25, 0
      %p67 = por %p65, %p66
      %p68 = scmp.ne.s32.totalorder %s54, %s55
      %p69 = scmp.eq.s32.totalorder %s26, 1
      %p70 = por %p68, %p69
      %p72 = scmp.ne.s32.totalorder %s55, %s71
      %p73 = scmp.eq.s32.totalorder %s26, 0
      %p74 = por %p72, %p73
      %s76 = sadd.s32 %s75, 1
      %p79 = scmp.eq.s32.totalorder %s20, 1
      %p80 = scmp.ne.s32.totalorder %s75, %s77
      %p81 = scmp.eq.s32.totalorder %s20, 0
      %p82 = por %p80, %p81
      %p83 = scmp.ne.s32.totalorder %s75, %s77
      %p84 = scmp.eq.s32.totalorder %s25, 1
      %p85 = por %p83, %p84
      %p86 = scmp.ne.s32.totalorder %s77, %s78
      %p87 = scmp.eq.s32.totalorder %s25, 0
      %p88 = por %p86, %p87
      %p89 = scmp.ne.s32.totalorder %s77, %s78
      %p90 = scmp.eq.s32.totalorder %s26, 1
      %p91 = por %p89, %p90
      %p93 = scmp.ne.s32.totalorder %s78, %s92
      %p94 = scmp.eq.s32.totalorder %s26, 0
      %p95 = por %p93, %p94
      %s97 = sadd.s32 %s96, 1
      %p100 = scmp.eq.s32.totalorder %s20, 1
      %p101 = scmp.ne.s32.totalorder %s96, %s98
      %p102 = scmp.eq.s32.totalorder %s20, 0
      %p103 = por %p101, %p102
      %p104 = scmp.ne.s32.totalorder %s96, %s98
      %p105 = scmp.eq.s32.totalorder %s25, 1
      %p106 = por %p104, %p105
      %p107 = scmp.ne.s32.totalorder %s98, %s99
      %p108 = scmp.eq.s32.totalorder %s25, 0
      %p109 = por %p107, %p108
      %p110 = scmp.ne.s32.totalorder %s98, %s99
      %p111 = scmp.eq.s32.totalorder %s26, 1
      %p112 = por %p110, %p111
      %p114 = scmp.ne.s32.totalorder %s99, %s113
      %p115 = scmp.eq.s32.totalorder %s26, 0
      %p116 = por %p114, %p115
      %s118 = sadd.s32 %s117, 1
      %p121 = scmp.eq.s32.totalorder %s20, 1
      %p122 = scmp.ne.s32.totalorder %s117, %s119
      %p123 = scmp.eq.s32.totalorder %s20, 0
      %p124 = por %p122, %p123
      %p125 = scmp.ne.s32.totalorder %s117, %s119
      %p126 = scmp.eq.s32.totalorder %s25, 1
      %p127 = por %p125, %p126
      %p128 = scmp.ne.s32.totalorder %s119, %s120
      %p129 = scmp.eq.s32.totalorder %s25, 0
      %p130 = por %p128, %p129
      %p131 = scmp.ne.s32.totalorder %s119, %s120
      %p132 = scmp.eq.s32.totalorder %s26, 1
      %p133 = por %p131, %p132
      %p135 = scmp.ne.s32.totalorder %s120, %s134
      %p136 = scmp.eq.s32.totalorder %s26, 0
      %p137 = por %p135, %p136
      %s139 = sadd.s32 %s138, 1
      %p142 = scmp.eq.s32.totalorder %s20, 1
      %p143 = scmp.ne.s32.totalorder %s138, %s140
      %p144 = scmp.eq.s32.totalorder %s20, 0
      %p145 = por %p143, %p144
      %p146 = scmp.ne.s32.totalorder %s138, %s140
      %p147 = scmp.eq.s32.totalorder %s25, 1
      %p148 = por %p146, %p147
      %p149 = scmp.ne.s32.totalorder %s140, %s141
      %p150 = scmp.eq.s32.totalorder %s25, 0
      %p151 = por %p149, %p150
      %p152 = scmp.ne.s32.totalorder %s140, %s141
      %p153 = scmp.eq.s32.totalorder %s26, 1
      %p154 = por %p152, %p153
      %p156 = scmp.ne.s32.totalorder %s141, %s155
      %p157 = scmp.eq.s32.totalorder %s26, 0
      %p158 = por %p156, %p157
      %s160 = sadd.s32 %s159, 1
      %p163 = scmp.eq.s32.totalorder %s20, 1
      %p164 = scmp.ne.s32.totalorder %s159, %s161
      %p165 = scmp.eq.s32.totalorder %s20, 0
      %p166 = por %p164, %p165
      %p167 = scmp.ne.s32.totalorder %s159, %s161
      %p168 = scmp.eq.s32.totalorder %s25, 1
      %p169 = por %p167, %p168
      %p170 = scmp.ne.s32.totalorder %s161, %s162
      %p171 = scmp.eq.s32.totalorder %s25, 0
      %p172 = por %p170, %p171
      %p173 = scmp.ne.s32.totalorder %s161, %s162
      %p174 = scmp.eq.s32.totalorder %s26, 1
      %p175 = por %p173, %p174
      %p177 = scmp.ne.s32.totalorder %s162, %s176
      %p178 = scmp.eq.s32.totalorder %s26, 0
      %p179 = por %p177, %p178
      %s181 = sadd.s32 %s180, 1
      %p184 = scmp.eq.s32.totalorder %s20, 1
      %p185 = scmp.ne.s32.totalorder %s180, %s182
      %p186 = scmp.eq.s32.totalorder %s20, 0
      %p187 = por %p185, %p186
      %p188 = scmp.ne.s32.totalorder %s180, %s182
      %p189 = scmp.eq.s32.totalorder %s25, 1
      %p190 = por %p188, %p189
      %p191 = scmp.ne.s32.totalorder %s182, %s183
      %p192 = scmp.eq.s32.totalorder %s25, 0
      %p193 = por %p191, %p192
      %p194 = scmp.ne.s32.totalorder %s182, %s183
      %p195 = scmp.eq.s32.totalorder %s26, 1
      %p196 = por %p194, %p195
      %p198 = scmp.ne.s32.totalorder %s183, %s197
      %p199 = scmp.eq.s32.totalorder %s26, 0
      %p200 = por %p198, %p199
      %s202 = sadd.s32 %s201, 1
      %p205 = scmp.eq.s32.totalorder %s20, 1
      %p206 = scmp.ne.s32.totalorder %s201, %s203
      %p207 = scmp.eq.s32.totalorder %s20, 0
      %p208 = por %p206, %p207
      %p209 = scmp.ne.s32.totalorder %s201, %s203
      %p210 = scmp.eq.s32.totalorder %s25, 1
      %p211 = por %p209, %p210
      %p212 = scmp.ne.s32.totalorder %s203, %s204
      %p213 = scmp.eq.s32.totalorder %s25, 0
      %p214 = por %p212, %p213
      %p215 = scmp.ne.s32.totalorder %s203, %s204
      %p216 = scmp.eq.s32.totalorder %s26, 1
      %p217 = por %p215, %p216
      %p219 = scmp.ne.s32.totalorder %s204, %s218
      %p220 = scmp.eq.s32.totalorder %s26, 0
      %p221 = por %p219, %p220
      %s223 = sadd.s32 %s222, 1
      %p226 = scmp.eq.s32.totalorder %s20, 1
      %p227 = scmp.ne.s32.totalorder %s222, %s224
      %p228 = scmp.eq.s32.totalorder %s20, 0
      %p229 = por %p227, %p228
      %p230 = scmp.ne.s32.totalorder %s222, %s224
      %p231 = scmp.eq.s32.totalorder %s25, 1
      %p232 = por %p230, %p231
      %p233 = scmp.ne.s32.totalorder %s224, %s225
      %p234 = scmp.eq.s32.totalorder %s25, 0
      %p235 = por %p233, %p234
      %p236 = scmp.ne.s32.totalorder %s224, %s225
      %p237 = scmp.eq.s32.totalorder %s26, 1
      %p238 = por %p236, %p237
      %p240 = scmp.ne.s32.totalorder %s225, %s239
      %p241 = scmp.eq.s32.totalorder %s26, 0
      %p242 = por %p240, %p241
      %s243 = ssub.s32 %s20, %s27
      %p244 = scmp.eq.s32.totalorder %s243, 0
      %s246 = sadd.s32 %s245, 1
      %s247 = scalar_select %p244, %s245, %s246
      %p250 = pneg %p244
      %p251 = scmp.eq.s32.totalorder %s20, 1
      %p252 = por %p250, %p251
      %p253 = scmp.ne.s32.totalorder %s245, %s248
      %p254 = scmp.eq.s32.totalorder %s20, 0
      %p255 = por %p253, %p254
      %p256 = scmp.ne.s32.totalorder %s245, %s248
      %p257 = scmp.eq.s32.totalorder %s25, 1
      %p258 = por %p256, %p257
      %p259 = scmp.ne.s32.totalorder %s248, %s249
      %p260 = scmp.eq.s32.totalorder %s25, 0
      %p261 = por %p259, %p260
      %p262 = scmp.ne.s32.totalorder %s248, %s249
      %p263 = scmp.eq.s32.totalorder %s26, 1
      %p264 = por %p262, %p263
      %p266 = scmp.ne.s32.totalorder %s249, %s265
      %p267 = scmp.eq.s32.totalorder %s26, 0
      %p268 = por %p266, %p267
      %p269 = scmp.le.s32.totalorder 1, %s20
      %p270 = scmp.lt.s32.totalorder %s20, 3
      %p271 = pnand %p269, %p270
      %p272 = pneg %p271
      // Predicated region
      $region9: #{prototype_prompt_encoder_forward.3} parent=5 // pred_check
        _
      $region10: #{prototype_prompt_encoder_forward.3} parent=5 // pred_check_branch
        %274 = sbr.rel (%p271) target = $region12
      $region11: #{prototype_prompt_encoder_forward.3} parent=5 // pred_region
        %s275 = ssub.s32 %s20, 1
        // Predicated region
        $region13: #{prototype_prompt_encoder_forward.3} parent=11 // pred_check
          %p276 = pneg %p41
        $region14: #{prototype_prompt_encoder_forward.3} parent=11 // pred_check_branch
          %278 = sbr.rel (%p276) target = $region16
        $region15: #{prototype_prompt_encoder_forward.3} parent=11 // pred_region
          %s280 = ssub.s32 16, 16
          %281 = vsyncadd [#allocation4], %s280
          %s283 = sshll.u32 %s0, 4
          %s284 = int_to_ptr.vmem [resolvable:$true] %s283
          %286 = dma.vmem_to_smem %s284, 16, [#allocation2], [#allocation4]
        $region16: #{prototype_prompt_encoder_forward.3} parent=11 // pred_fallthru
          _
        // Predicated region
        $region17: #{prototype_prompt_encoder_forward.3} parent=11 // pred_check
          %p287 = pneg %p88
        $region18: #{prototype_prompt_encoder_forward.3} parent=11 // pred_check_branch
          %289 = sbr.rel (%p287) target = $region20
        $region19: #{prototype_prompt_encoder_forward.3} parent=11 // pred_region
          _
        $region20: #{prototype_prompt_encoder_forward.3} parent=11 // pred_fallthru
          _
        // Predicated region
        $region21: #{prototype_prompt_encoder_forward.3} parent=11 // pred_check
          %p290 = pneg %p109
        $region22: #{prototype_prompt_encoder_forward.3} parent=11 // pred_check_branch
          %292 = sbr.rel (%p290) target = $region24
        $region23: #{prototype_prompt_encoder_forward.3} parent=11 // pred_region
          _
        $region24: #{prototype_prompt_encoder_forward.3} parent=11 // pred_fallthru
          _
        // Predicated region
        $region25: #{prototype_prompt_encoder_forward.3} parent=11 // pred_check
          %p293 = pneg %p130
        $region26: #{prototype_prompt_encoder_forward.3} parent=11 // pred_check_branch
          %295 = sbr.rel (%p293) target = $region28
        $region27: #{prototype_prompt_encoder_forward.3} parent=11 // pred_region
          _
        $region28: #{prototype_prompt_encoder_forward.3} parent=11 // pred_fallthru
          _
        // Predicated region
        $region29: #{prototype_prompt_encoder_forward.3} parent=11 // pred_check
          %p296 = pneg %p151
        $region30: #{prototype_prompt_encoder_forward.3} parent=11 // pred_check_branch
          %298 = sbr.rel (%p296) target = $region32
        $region31: #{prototype_prompt_encoder_forward.3} parent=11 // pred_region
          _
        $region32: #{prototype_prompt_encoder_forward.3} parent=11 // pred_fallthru
          _
        // Predicated region
        $region33: #{prototype_prompt_encoder_forward.3} parent=11 // pred_check
          %p299 = pneg %p172
        $region34: #{prototype_prompt_encoder_forward.3} parent=11 // pred_check_branch
          %301 = sbr.rel (%p299) target = $region36
        $region35: #{prototype_prompt_encoder_forward.3} parent=11 // pred_region
          _
        $region36: #{prototype_prompt_encoder_forward.3} parent=11 // pred_fallthru
          _
        // Predicated region
        $region37: #{prototype_prompt_encoder_forward.3} parent=11 // pred_check
          %p302 = pneg %p193
        $region38: #{prototype_prompt_encoder_forward.3} parent=11 // pred_check_branch
          %304 = sbr.rel (%p302) target = $region40
        $region39: #{prototype_prompt_encoder_forward.3} parent=11 // pred_region
          _
        $region40: #{prototype_prompt_encoder_forward.3} parent=11 // pred_fallthru
          _
        // Predicated region
        $region41: #{prototype_prompt_encoder_forward.3} parent=11 // pred_check
          %p305 = pneg %p214
        $region42: #{prototype_prompt_encoder_forward.3} parent=11 // pred_check_branch
          %307 = sbr.rel (%p305) target = $region44
        $region43: #{prototype_prompt_encoder_forward.3} parent=11 // pred_region
          _
        $region44: #{prototype_prompt_encoder_forward.3} parent=11 // pred_fallthru
          _
        // Predicated region
        $region45: #{prototype_prompt_encoder_forward.3} parent=11 // pred_check
          %p308 = pneg %p235
        $region46: #{prototype_prompt_encoder_forward.3} parent=11 // pred_check_branch
          %310 = sbr.rel (%p308) target = $region48
        $region47: #{prototype_prompt_encoder_forward.3} parent=11 // pred_region
          _
        $region48: #{prototype_prompt_encoder_forward.3} parent=11 // pred_fallthru
          _
      $region12: #{prototype_prompt_encoder_forward.3} parent=5 // pred_fallthru
        _
      %p311 = scmp.lt.s32.totalorder %s20, 2
      // Predicated region
      $region49: #{prototype_prompt_encoder_forward.3} parent=5 // pred_check
        %p312 = pneg %p311
      $region50: #{prototype_prompt_encoder_forward.3} parent=5 // pred_check_branch
        %314 = sbr.rel (%p312) target = $region52
      $region51: #{prototype_prompt_encoder_forward.3} parent=5 // pred_region
        // Predicated region
        $region53: #{prototype_prompt_encoder_forward.3} parent=51 // pred_check
          %p315 = pneg %p61
        $region54: #{prototype_prompt_encoder_forward.3} parent=51 // pred_check_branch
          %317 = sbr.rel (%p315) target = $region56
        $region55: #{prototype_prompt_encoder_forward.3} parent=51 // pred_region
          %p318 = scmp.lt.s32.totalorder %s20, 1
          %s319 = scalar_select %p318, %s20, 1
          %s320 = smul.addr %s319, 4
          %s321 = smul.addr %s320, 8
          %s322 = scalar_lea.vmem %s1, %s321
        $region56: #{prototype_prompt_encoder_forward.3} parent=51 // pred_fallthru
          _
      $region52: #{prototype_prompt_encoder_forward.3} parent=5 // pred_fallthru
        _
      %p323 = scmp.le.s32.totalorder 1, %s20
      %p324 = scmp.lt.s32.totalorder %s20, 3
      %p325 = pnand %p323, %p324
      %p326 = pneg %p325
      // Predicated region
      $region57: #{prototype_prompt_encoder_forward.3} parent=5 // pred_check
        _
      $region58: #{prototype_prompt_encoder_forward.3} parent=5 // pred_check_branch
        %328 = sbr.rel (%p325) target = $region60
      $region59: #{prototype_prompt_encoder_forward.3} parent=5 // pred_region
        %s329 = ssub.s32 %s20, 1
        // Predicated region
        $region61: #{prototype_prompt_encoder_forward.3} parent=59 // pred_check
          %p330 = pneg %p41
        $region62: #{prototype_prompt_encoder_forward.3} parent=59 // pred_check_branch
          %332 = sbr.rel (%p330) target = $region64
        $region63: #{prototype_prompt_encoder_forward.3} parent=59 // pred_region
          %333 = dma.done [#allocation4], 16
        $region64: #{prototype_prompt_encoder_forward.3} parent=59 // pred_fallthru
          _
        %334 = sfence
        %p335 = pneg %p41
        %p336 = pneg %p38
        %p337 = scmp.lt.s32.totalorder %s25, 1
        %s338 = scalar_select %p337, %s25, 1
        %s339 = smul.addr %s338, 4
        %s340 = smul.addr %s339, 8
        %s341 = scalar_lea.vmem %s1, %s340
        %p342 = pneg %p67
        %p343 = pneg %p64
        %p344 = pneg %p88
        %p345 = pneg %p85
        %p346 = pneg %p109
        %p347 = pneg %p106
        %p348 = pneg %p130
        %p349 = pneg %p127
        %p350 = pneg %p151
        %p351 = pneg %p148
        %p352 = pneg %p172
        %p353 = pneg %p169
        %p354 = pneg %p193
        %p355 = pneg %p190
        %p356 = pneg %p214
        %p357 = pneg %p211
        %p358 = pneg %p235
        %p359 = pneg %p232
        %p360 = pneg %p261
        %p361 = pneg %p258
        %s362 = sand.u32 %s248, 1
        %s363 = scalar_lea.sflag [#allocation3], %s362
        %s364 = sand.u32 %s248, 1
        %s365 = smul.addr %s364, 56
        %s366 = scalar_lea.vmem [#allocation5], %s365
        %p367 = scmp.lt.s32.totalorder %s25, 1
        %s368 = scalar_select %p367, %s25, 1
        %s369 = smul.addr %s368, 4
        %s370 = smul.addr %s369, 8
        %s371 = scalar_lea.vmem %s1, %s370
        %v373 = vld [vmem:[%s371] sm:$0xff]
        %v374 = vld [vmem:[%s371 + $0x8] sm:$0xff]
        %v375 = vld [vmem:[%s371 + $0x10] sm:$0xff]
        %v376 = vld [vmem:[%s371 + $0x18] sm:$0xff]
        %v377 = vld [vmem:[%s2] sm:$0x1]
        %v378 = vld [vmem:[%s2 + $0x1] sm:$0x1]
        %v379 = vld [vmem:[%s2 + $0x2] sm:$0x1]
        %v380 = vld [vmem:[%s2 + $0x3] sm:$0x1]
        %v381 = vld [vmem:[%s2 + $0x4] sm:$0x1]
        %v382 = vld [vmem:[%s2 + $0x5] sm:$0x1]
        %v383 = vld [vmem:[%s2 + $0x6] sm:$0x1]
        %v391 = vlaneseq
        %v392 = vshrl.u32 %v391, 7
        %v393 = vsub.s32 0, %v392
        %v394 = vrot.slane %v377, %v393
        %v395 = vlaneseq
        %v396 = vshrl.u32 %v395, 7
        %v397 = vsub.s32 0, %v396
        %v398 = vrot.slane %v378, %v397
        %v399 = vlaneseq
        %v400 = vshrl.u32 %v399, 7
        %v401 = vsub.s32 0, %v400
        %v402 = vrot.slane %v379, %v401
        %v403 = vlaneseq
        %v404 = vshrl.u32 %v403, 7
        %v405 = vsub.s32 0, %v404
        %v406 = vrot.slane %v380, %v405
        %v407 = vlaneseq
        %v408 = vshrl.u32 %v407, 7
        %v409 = vsub.s32 0, %v408
        %v410 = vrot.slane %v381, %v409
        %v411 = vlaneseq
        %v412 = vshrl.u32 %v411, 7
        %v413 = vsub.s32 0, %v412
        %v414 = vrot.slane %v382, %v413
        %v415 = vlaneseq
        %v416 = vshrl.u32 %v415, 7
        %v417 = vsub.s32 0, %v416
        %v418 = vrot.slane %v383, %v417
        %v426 = vmul.f32 %v394, %v373
        %v427 = vmul.f32 %v394, %v374
        %v428 = vmul.f32 %v394, %v375
        %v429 = vmul.f32 %v394, %v376
        %v430 = vmul.f32 %v398, %v373
        %v431 = vmul.f32 %v398, %v374
        %v432 = vmul.f32 %v398, %v375
        %v433 = vmul.f32 %v398, %v376
        %v434 = vmul.f32 %v402, %v373
        %v435 = vmul.f32 %v402, %v374
        %v436 = vmul.f32 %v402, %v375
        %v437 = vmul.f32 %v402, %v376
        %v438 = vmul.f32 %v406, %v373
        %v439 = vmul.f32 %v406, %v374
        %v440 = vmul.f32 %v406, %v375
        %v441 = vmul.f32 %v406, %v376
        %v442 = vmul.f32 %v410, %v373
        %v443 = vmul.f32 %v410, %v374
        %v444 = vmul.f32 %v410, %v375
        %v445 = vmul.f32 %v410, %v376
        %v446 = vmul.f32 %v414, %v373
        %v447 = vmul.f32 %v414, %v374
        %v448 = vmul.f32 %v414, %v375
        %v449 = vmul.f32 %v414, %v376
        %v450 = vmul.f32 %v418, %v373
        %v451 = vmul.f32 %v418, %v374
        %v452 = vmul.f32 %v418, %v375
        %v453 = vmul.f32 %v418, %v376
        %v454 = vld [vmem:[%s4] sm:$0xff]
        %v455 = vld [vmem:[%s4 + $0x8] sm:$0xff]
        %v456 = vld [vmem:[%s4 + $0x10] sm:$0xff]
        %v457 = vld [vmem:[%s4 + $0x18] sm:$0xff]
        %v458 = vld [vmem:[%s3] sm:$0x1]
        %v459 = vld [vmem:[%s3 + $0x1] sm:$0x1]
        %v460 = vld [vmem:[%s3 + $0x2] sm:$0x1]
        %v461 = vld [vmem:[%s3 + $0x3] sm:$0x1]
        %v462 = vld [vmem:[%s3 + $0x4] sm:$0x1]
        %v463 = vld [vmem:[%s3 + $0x5] sm:$0x1]
        %v464 = vld [vmem:[%s3 + $0x6] sm:$0x1]
        %466 = vset.pattern.permute.xlu0 0
        %467 = vperm.xlu0 %466, %v454
        %v468 = vpop.permute.xlu0 %467
        %471 = vset.pattern.permute.xlu0 0
        %472 = vperm.xlu0 %471, %v455
        %v473 = vpop.permute.xlu0 %472
        %476 = vset.pattern.permute.xlu0 0
        %477 = vperm.xlu0 %476, %v456
        %v478 = vpop.permute.xlu0 %477
        %481 = vset.pattern.permute.xlu0 0
        %482 = vperm.xlu0 %481, %v457
        %v483 = vpop.permute.xlu0 %482
        %v492 = vlaneseq
        %v493 = vshrl.u32 %v492, 7
        %v494 = vsub.s32 0, %v493
        %v495 = vrot.slane %v458, %v494
        %v496 = vlaneseq
        %v497 = vshrl.u32 %v496, 7
        %v498 = vsub.s32 0, %v497
        %v499 = vrot.slane %v459, %v498
        %v500 = vlaneseq
        %v501 = vshrl.u32 %v500, 7
        %v502 = vsub.s32 0, %v501
        %v503 = vrot.slane %v460, %v502
        %v504 = vlaneseq
        %v505 = vshrl.u32 %v504, 7
        %v506 = vsub.s32 0, %v505
        %v507 = vrot.slane %v461, %v506
        %v508 = vlaneseq
        %v509 = vshrl.u32 %v508, 7
        %v510 = vsub.s32 0, %v509
        %v511 = vrot.slane %v462, %v510
        %v512 = vlaneseq
        %v513 = vshrl.u32 %v512, 7
        %v514 = vsub.s32 0, %v513
        %v515 = vrot.slane %v463, %v514
        %v516 = vlaneseq
        %v517 = vshrl.u32 %v516, 7
        %v518 = vsub.s32 0, %v517
        %v519 = vrot.slane %v464, %v518
        %v527 = vmul.f32 %v468, %v495
        %v528 = vmul.f32 %v473, %v495
        %v529 = vmul.f32 %v478, %v495
        %v530 = vmul.f32 %v483, %v495
        %v531 = vmul.f32 %v468, %v499
        %v532 = vmul.f32 %v473, %v499
        %v533 = vmul.f32 %v478, %v499
        %v534 = vmul.f32 %v483, %v499
        %v535 = vmul.f32 %v468, %v503
        %v536 = vmul.f32 %v473, %v503
        %v537 = vmul.f32 %v478, %v503
        %v538 = vmul.f32 %v483, %v503
        %v539 = vmul.f32 %v468, %v507
        %v540 = vmul.f32 %v473, %v507
        %v541 = vmul.f32 %v478, %v507
        %v542 = vmul.f32 %v483, %v507
        %v543 = vmul.f32 %v468, %v511
        %v544 = vmul.f32 %v473, %v511
        %v545 = vmul.f32 %v478, %v511
        %v546 = vmul.f32 %v483, %v511
        %v547 = vmul.f32 %v468, %v515
        %v548 = vmul.f32 %v473, %v515
        %v549 = vmul.f32 %v478, %v515
        %v550 = vmul.f32 %v483, %v515
        %v551 = vmul.f32 %v468, %v519
        %v552 = vmul.f32 %v473, %v519
        %v553 = vmul.f32 %v478, %v519
        %v554 = vmul.f32 %v483, %v519
        %v555 = vadd.f32 %v426, %v527
        %v556 = vadd.f32 %v427, %v528
        %v557 = vadd.f32 %v428, %v529
        %v558 = vadd.f32 %v429, %v530
        %v559 = vadd.f32 %v430, %v531
        %v560 = vadd.f32 %v431, %v532
        %v561 = vadd.f32 %v432, %v533
        %v562 = vadd.f32 %v433, %v534
        %v563 = vadd.f32 %v434, %v535
        %v564 = vadd.f32 %v435, %v536
        %v565 = vadd.f32 %v436, %v537
        %v566 = vadd.f32 %v437, %v538
        %v567 = vadd.f32 %v438, %v539
        %v568 = vadd.f32 %v439, %v540
        %v569 = vadd.f32 %v440, %v541
        %v570 = vadd.f32 %v441, %v542
        %v571 = vadd.f32 %v442, %v543
        %v572 = vadd.f32 %v443, %v544
        %v573 = vadd.f32 %v444, %v545
        %v574 = vadd.f32 %v445, %v546
        %v575 = vadd.f32 %v446, %v547
        %v576 = vadd.f32 %v447, %v548
        %v577 = vadd.f32 %v448, %v549
        %v578 = vadd.f32 %v449, %v550
        %v579 = vadd.f32 %v450, %v551
        %v580 = vadd.f32 %v451, %v552
        %v581 = vadd.f32 %v452, %v553
        %v582 = vadd.f32 %v453, %v554
        %v583 = vld [vmem:[%s5] sm:$0xff]
        %v584 = vld [vmem:[%s5 + $0x8] sm:$0xff]
        %v585 = vld [vmem:[%s5 + $0x10] sm:$0xff]
        %v586 = vld [vmem:[%s5 + $0x18] sm:$0xff]
        %588 = vset.pattern.permute.xlu0 0
        %589 = vperm.xlu0 %588, %v583
        %v590 = vpop.permute.xlu0 %589
        %593 = vset.pattern.permute.xlu0 0
        %594 = vperm.xlu0 %593, %v584
        %v595 = vpop.permute.xlu0 %594
        %598 = vset.pattern.permute.xlu0 0
        %599 = vperm.xlu0 %598, %v585
        %v600 = vpop.permute.xlu0 %599
        %603 = vset.pattern.permute.xlu0 0
        %604 = vperm.xlu0 %603, %v586
        %v605 = vpop.permute.xlu0 %604
        %v607 = vadd.f32 %v555, %v590
        %v608 = vadd.f32 %v556, %v595
        %v609 = vadd.f32 %v557, %v600
        %v610 = vadd.f32 %v558, %v605
        %v611 = vadd.f32 %v559, %v590
        %v612 = vadd.f32 %v560, %v595
        %v613 = vadd.f32 %v561, %v600
        %v614 = vadd.f32 %v562, %v605
        %v615 = vadd.f32 %v563, %v590
        %v616 = vadd.f32 %v564, %v595
        %v617 = vadd.f32 %v565, %v600
        %v618 = vadd.f32 %v566, %v605
        %v619 = vadd.f32 %v567, %v590
        %v620 = vadd.f32 %v568, %v595
        %v621 = vadd.f32 %v569, %v600
        %v622 = vadd.f32 %v570, %v605
        %v623 = vadd.f32 %v571, %v590
        %v624 = vadd.f32 %v572, %v595
        %v625 = vadd.f32 %v573, %v600
        %v626 = vadd.f32 %v574, %v605
        %v627 = vadd.f32 %v575, %v590
        %v628 = vadd.f32 %v576, %v595
        %v629 = vadd.f32 %v577, %v600
        %v630 = vadd.f32 %v578, %v605
        %v631 = vadd.f32 %v579, %v590
        %v632 = vadd.f32 %v580, %v595
        %v633 = vadd.f32 %v581, %v600
        %v634 = vadd.f32 %v582, %v605
        %v635 = vmax.f32 %v607, 0.0
        %v636 = vmax.f32 %v608, 0.0
        %v637 = vmax.f32 %v609, 0.0
        %v638 = vmax.f32 %v610, 0.0
        %v639 = vmax.f32 %v611, 0.0
        %v640 = vmax.f32 %v612, 0.0
        %v641 = vmax.f32 %v613, 0.0
        %v642 = vmax.f32 %v614, 0.0
        %v643 = vmax.f32 %v615, 0.0
        %v644 = vmax.f32 %v616, 0.0
        %v645 = vmax.f32 %v617, 0.0
        %v646 = vmax.f32 %v618, 0.0
        %v647 = vmax.f32 %v619, 0.0
        %v648 = vmax.f32 %v620, 0.0
        %v649 = vmax.f32 %v621, 0.0
        %v650 = vmax.f32 %v622, 0.0
        %v651 = vmax.f32 %v623, 0.0
        %v652 = vmax.f32 %v624, 0.0
        %v653 = vmax.f32 %v625, 0.0
        %v654 = vmax.f32 %v626, 0.0
        %v655 = vmax.f32 %v627, 0.0
        %v656 = vmax.f32 %v628, 0.0
        %v657 = vmax.f32 %v629, 0.0
        %v658 = vmax.f32 %v630, 0.0
        %v659 = vmax.f32 %v631, 0.0
        %v660 = vmax.f32 %v632, 0.0
        %v661 = vmax.f32 %v633, 0.0
        %v662 = vmax.f32 %v634, 0.0
        %v663 = vpack.c.bf16 %v636, %v635
        %v664 = vpack.c.bf16 %v638, %v637
        %v665 = vpack.c.bf16 %v640, %v639
        %v666 = vpack.c.bf16 %v642, %v641
        %v667 = vpack.c.bf16 %v644, %v643
        %v668 = vpack.c.bf16 %v646, %v645
        %v669 = vpack.c.bf16 %v648, %v647
        %v670 = vpack.c.bf16 %v650, %v649
        %v671 = vpack.c.bf16 %v652, %v651
        %v672 = vpack.c.bf16 %v654, %v653
        %v673 = vpack.c.bf16 %v656, %v655
        %v674 = vpack.c.bf16 %v658, %v657
        %v675 = vpack.c.bf16 %v660, %v659
        %v676 = vpack.c.bf16 %v662, %v661
        %v677 = vld [vmem:[%s7] sm:$0xf]
        %v678 = vld [vmem:[%s9] sm:$0xff]
        %v679 = vld [vmem:[%s8] sm:$0xff]
        %v680 = vsub.f32 %v679, %v678
        %s681 = sld [smem:[#allocation2 + %s25]]
        %v682 = vld [vmem:[%s6] sm:$0xff]
        %684 = vset.pattern.permute.xlu0 0
        %685 = vperm.xlu0 %684, %v682
        %v686 = vpop.permute.xlu0 %685
        %vm688 = vcmask 261120
        %v690 = vsel %vm688, %v677, 0
        %692 = vmatprep.subr.bf16.mxu0 0
        %693 = vmatpush1.bf16.msra.mxu0 0
        %694 = vmatprep.subr.bf16.mxu0 0
        %695 = vmatpush1.bf16.msra.mxu0 0
        %696 = vmatprep.subr.bf16.mxu0 0
        %697 = vmatpush1.bf16.msra.mxu0 0
        %698 = vmatprep.subr.bf16.mxu0 0
        %699 = vmatpush1.bf16.msra.mxu0 0
        %700 = vmatprep.subr.bf16.mxu0 0
        %701 = vmatpush1.bf16.msra.mxu0 0
        %702 = vmatprep.subr.bf16.mxu0 0
        %703 = vmatpush1.bf16.msra.mxu0 0
        %704 = vmatprep.subr.bf16.mxu0 0
        %705 = vmatpush1.bf16.msra.mxu0 %v664
        %706 = vmatprep.subr.bf16.mxu0 0
        %707 = vmatpush1.bf16.msra.mxu0 %v663
        %708 = vmatprep.subr.bf16.mxu0 0
        %709 = vmatpush2.bf16.msra.mxu0 0
        %710 = vmatprep.subr.bf16.mxu0 0
        %711 = vmatpush2.bf16.msra.mxu0 0
        %712 = vmatprep.subr.bf16.mxu0 0
        %713 = vmatpush2.bf16.msra.mxu0 0
        %714 = vmatprep.subr.bf16.mxu0 0
        %715 = vmatpush2.bf16.msra.mxu0 0
        %716 = vmatprep.subr.bf16.mxu0 0
        %717 = vmatpush2.bf16.msra.mxu0 0
        %718 = vmatprep.subr.bf16.mxu0 0
        %719 = vmatpush2.bf16.msra.mxu0 0
        %720 = vmatprep.subr.bf16.mxu0 0
        %721 = vmatpush2.bf16.msra.mxu0 0
        %722 = vmatprep.subr.bf16.mxu0 0
        %723 = vmatpush2.bf16.msra.mxu0 0
        %724 = vmatprep.mubr.bf16.mxu0 0
        %725 = vmatmul.mubr.bf16.gmra.mxu0 %v690
        %v726 = vpop.f32.mrf.mxu0
        %v727 = vadd.f32 %v686, %v726
        %v728 = vpop.f32.mrf.mxu0
        %v729 = vpop.f32.mrf.mxu0
        %v730 = vpop.f32.mrf.mxu0
        %731 = vdwg.mxu0
        %p732 = scmp.eq.s32.totalorder %s681, 0
        %s733 = scalar_select %p732, 1, 0
        %s734 = scvt.s32.f32 %s733
        %v735 = vadd.f32 %v727, %v678
        %v736 = vstv %s734
        %v737 = vmul.f32 %v736, %v680
        %v738 = vadd.f32 %v735, %v737
        %739 = vst [vmem:[%s366] sm:$0xff] %v738
        %v740 = vld [vmem:[%s6] sm:$0xff]
        %742 = vset.pattern.permute.xlu0 0
        %743 = vperm.xlu0 %742, %v740
        %v744 = vpop.permute.xlu0 %743
        %746 = vmatprep.subr.bf16.mxu0 0
        %747 = vmatpush1.bf16.msra.mxu0 0
        %748 = vmatprep.subr.bf16.mxu0 0
        %749 = vmatpush1.bf16.msra.mxu0 0
        %750 = vmatprep.subr.bf16.mxu0 0
        %751 = vmatpush1.bf16.msra.mxu0 0
        %752 = vmatprep.subr.bf16.mxu0 0
        %753 = vmatpush1.bf16.msra.mxu0 0
        %754 = vmatprep.subr.bf16.mxu0 0
        %755 = vmatpush1.bf16.msra.mxu0 0
        %756 = vmatprep.subr.bf16.mxu0 0
        %757 = vmatpush1.bf16.msra.mxu0 0
        %758 = vmatprep.subr.bf16.mxu0 0
        %759 = vmatpush1.bf16.msra.mxu0 %v666
        %760 = vmatprep.subr.bf16.mxu0 0
        %761 = vmatpush1.bf16.msra.mxu0 %v665
        %762 = vmatprep.subr.bf16.mxu0 0
        %763 = vmatpush2.bf16.msra.mxu0 0
        %764 = vmatprep.subr.bf16.mxu0 0
        %765 = vmatpush2.bf16.msra.mxu0 0
        %766 = vmatprep.subr.bf16.mxu0 0
        %767 = vmatpush2.bf16.msra.mxu0 0
        %768 = vmatprep.subr.bf16.mxu0 0
        %769 = vmatpush2.bf16.msra.mxu0 0
        %770 = vmatprep.subr.bf16.mxu0 0
        %771 = vmatpush2.bf16.msra.mxu0 0
        %772 = vmatprep.subr.bf16.mxu0 0
        %773 = vmatpush2.bf16.msra.mxu0 0
        %774 = vmatprep.subr.bf16.mxu0 0
        %775 = vmatpush2.bf16.msra.mxu0 0
        %776 = vmatprep.subr.bf16.mxu0 0
        %777 = vmatpush2.bf16.msra.mxu0 0
        %778 = vmatprep.mubr.bf16.mxu0 0
        %779 = vmatmul.mubr.bf16.gmra.mxu0 %v690
        %v780 = vpop.f32.mrf.mxu0
        %v781 = vadd.f32 %v744, %v780
        %v782 = vpop.f32.mrf.mxu0
        %v783 = vpop.f32.mrf.mxu0
        %v784 = vpop.f32.mrf.mxu0
        %785 = vdwg.mxu0
        %p786 = scmp.eq.s32.totalorder %s681, 1
        %s787 = scalar_select %p786, 1, 0
        %s788 = scvt.s32.f32 %s787
        %v789 = vadd.f32 %v781, %v678
        %v790 = vstv %s788
        %v791 = vmul.f32 %v790, %v680
        %v792 = vadd.f32 %v789, %v791
        %s793 = scalar_lea.vmem %s366, 8 [#allocation5]
        %794 = vst [vmem:[%s793] sm:$0xff] %v792
        %v795 = vld [vmem:[%s6] sm:$0xff]
        %797 = vset.pattern.permute.xlu0 0
        %798 = vperm.xlu0 %797, %v795
        %v799 = vpop.permute.xlu0 %798
        %801 = vmatprep.subr.bf16.mxu0 0
        %802 = vmatpush1.bf16.msra.mxu0 0
        %803 = vmatprep.subr.bf16.mxu0 0
        %804 = vmatpush1.bf16.msra.mxu0 0
        %805 = vmatprep.subr.bf16.mxu0 0
        %806 = vmatpush1.bf16.msra.mxu0 0
        %807 = vmatprep.subr.bf16.mxu0 0
        %808 = vmatpush1.bf16.msra.mxu0 0
        %809 = vmatprep.subr.bf16.mxu0 0
        %810 = vmatpush1.bf16.msra.mxu0 0
        %811 = vmatprep.subr.bf16.mxu0 0
        %812 = vmatpush1.bf16.msra.mxu0 0
        %813 = vmatprep.subr.bf16.mxu0 0
        %814 = vmatpush1.bf16.msra.mxu0 %v668
        %815 = vmatprep.subr.bf16.mxu0 0
        %816 = vmatpush1.bf16.msra.mxu0 %v667
        %817 = vmatprep.subr.bf16.mxu0 0
        %818 = vmatpush2.bf16.msra.mxu0 0
        %819 = vmatprep.subr.bf16.mxu0 0
        %820 = vmatpush2.bf16.msra.mxu0 0
        %821 = vmatprep.subr.bf16.mxu0 0
        %822 = vmatpush2.bf16.msra.mxu0 0
        %823 = vmatprep.subr.bf16.mxu0 0
        %824 = vmatpush2.bf16.msra.mxu0 0
        %825 = vmatprep.subr.bf16.mxu0 0
        %826 = vmatpush2.bf16.msra.mxu0 0
        %827 = vmatprep.subr.bf16.mxu0 0
        %828 = vmatpush2.bf16.msra.mxu0 0
        %829 = vmatprep.subr.bf16.mxu0 0
        %830 = vmatpush2.bf16.msra.mxu0 0
        %831 = vmatprep.subr.bf16.mxu0 0
        %832 = vmatpush2.bf16.msra.mxu0 0
        %833 = vmatprep.mubr.bf16.mxu0 0
        %834 = vmatmul.mubr.bf16.gmra.mxu0 %v690
        %v835 = vpop.f32.mrf.mxu0
        %v836 = vadd.f32 %v799, %v835
        %v837 = vpop.f32.mrf.mxu0
        %v838 = vpop.f32.mrf.mxu0
        %v839 = vpop.f32.mrf.mxu0
        %840 = vdwg.mxu0
        %p841 = scmp.eq.s32.totalorder %s681, 2
        %s842 = scalar_select %p841, 1, 0
        %s843 = scvt.s32.f32 %s842
        %v844 = vadd.f32 %v836, %v678
        %v845 = vstv %s843
        %v846 = vmul.f32 %v845, %v680
        %v847 = vadd.f32 %v844, %v846
        %s848 = scalar_lea.vmem %s366, 16 [#allocation5]
        %849 = vst [vmem:[%s848] sm:$0xff] %v847
        %v850 = vld [vmem:[%s6] sm:$0xff]
        %852 = vset.pattern.permute.xlu0 0
        %853 = vperm.xlu0 %852, %v850
        %v854 = vpop.permute.xlu0 %853
        %856 = vmatprep.subr.bf16.mxu0 0
        %857 = vmatpush1.bf16.msra.mxu0 0
        %858 = vmatprep.subr.bf16.mxu0 0
        %859 = vmatpush1.bf16.msra.mxu0 0
        %860 = vmatprep.subr.bf16.mxu0 0
        %861 = vmatpush1.bf16.msra.mxu0 0
        %862 = vmatprep.subr.bf16.mxu0 0
        %863 = vmatpush1.bf16.msra.mxu0 0
        %864 = vmatprep.subr.bf16.mxu0 0
        %865 = vmatpush1.bf16.msra.mxu0 0
        %866 = vmatprep.subr.bf16.mxu0 0
        %867 = vmatpush1.bf16.msra.mxu0 0
        %868 = vmatprep.subr.bf16.mxu0 0
        %869 = vmatpush1.bf16.msra.mxu0 %v670
        %870 = vmatprep.subr.bf16.mxu0 0
        %871 = vmatpush1.bf16.msra.mxu0 %v669
        %872 = vmatprep.subr.bf16.mxu0 0
        %873 = vmatpush2.bf16.msra.mxu0 0
        %874 = vmatprep.subr.bf16.mxu0 0
        %875 = vmatpush2.bf16.msra.mxu0 0
        %876 = vmatprep.subr.bf16.mxu0 0
        %877 = vmatpush2.bf16.msra.mxu0 0
        %878 = vmatprep.subr.bf16.mxu0 0
        %879 = vmatpush2.bf16.msra.mxu0 0
        %880 = vmatprep.subr.bf16.mxu0 0
        %881 = vmatpush2.bf16.msra.mxu0 0
        %882 = vmatprep.subr.bf16.mxu0 0
        %883 = vmatpush2.bf16.msra.mxu0 0
        %884 = vmatprep.subr.bf16.mxu0 0
        %885 = vmatpush2.bf16.msra.mxu0 0
        %886 = vmatprep.subr.bf16.mxu0 0
        %887 = vmatpush2.bf16.msra.mxu0 0
        %888 = vmatprep.mubr.bf16.mxu0 0
        %889 = vmatmul.mubr.bf16.gmra.mxu0 %v690
        %v890 = vpop.f32.mrf.mxu0
        %v891 = vadd.f32 %v854, %v890
        %v892 = vpop.f32.mrf.mxu0
        %v893 = vpop.f32.mrf.mxu0
        %v894 = vpop.f32.mrf.mxu0
        %895 = vdwg.mxu0
        %p896 = scmp.eq.s32.totalorder %s681, 3
        %s897 = scalar_select %p896, 1, 0
        %s898 = scvt.s32.f32 %s897
        %v899 = vadd.f32 %v891, %v678
        %v900 = vstv %s898
        %v901 = vmul.f32 %v900, %v680
        %v902 = vadd.f32 %v899, %v901
        %s903 = scalar_lea.vmem %s366, 24 [#allocation5]
        %904 = vst [vmem:[%s903] sm:$0xff] %v902
        %v905 = vld [vmem:[%s6] sm:$0xff]
        %907 = vset.pattern.permute.xlu0 0
        %908 = vperm.xlu0 %907, %v905
        %v909 = vpop.permute.xlu0 %908
        %911 = vmatprep.subr.bf16.mxu0 0
        %912 = vmatpush1.bf16.msra.mxu0 0
        %913 = vmatprep.subr.bf16.mxu0 0
        %914 = vmatpush1.bf16.msra.mxu0 0
        %915 = vmatprep.subr.bf16.mxu0 0
        %916 = vmatpush1.bf16.msra.mxu0 0
        %917 = vmatprep.subr.bf16.mxu0 0
        %918 = vmatpush1.bf16.msra.mxu0 0
        %919 = vmatprep.subr.bf16.mxu0 0
        %920 = vmatpush1.bf16.msra.mxu0 0
        %921 = vmatprep.subr.bf16.mxu0 0
        %922 = vmatpush1.bf16.msra.mxu0 0
        %923 = vmatprep.subr.bf16.mxu0 0
        %924 = vmatpush1.bf16.msra.mxu0 %v672
        %925 = vmatprep.subr.bf16.mxu0 0
        %926 = vmatpush1.bf16.msra.mxu0 %v671
        %927 = vmatprep.subr.bf16.mxu0 0
        %928 = vmatpush2.bf16.msra.mxu0 0
        %929 = vmatprep.subr.bf16.mxu0 0
        %930 = vmatpush2.bf16.msra.mxu0 0
        %931 = vmatprep.subr.bf16.mxu0 0
        %932 = vmatpush2.bf16.msra.mxu0 0
        %933 = vmatprep.subr.bf16.mxu0 0
        %934 = vmatpush2.bf16.msra.mxu0 0
        %935 = vmatprep.subr.bf16.mxu0 0
        %936 = vmatpush2.bf16.msra.mxu0 0
        %937 = vmatprep.subr.bf16.mxu0 0
        %938 = vmatpush2.bf16.msra.mxu0 0
        %939 = vmatprep.subr.bf16.mxu0 0
        %940 = vmatpush2.bf16.msra.mxu0 0
        %941 = vmatprep.subr.bf16.mxu0 0
        %942 = vmatpush2.bf16.msra.mxu0 0
        %943 = vmatprep.mubr.bf16.mxu0 0
        %944 = vmatmul.mubr.bf16.gmra.mxu0 %v690
        %v945 = vpop.f32.mrf.mxu0
        %v946 = vadd.f32 %v909, %v945
        %v947 = vpop.f32.mrf.mxu0
        %v948 = vpop.f32.mrf.mxu0
        %v949 = vpop.f32.mrf.mxu0
        %950 = vdwg.mxu0
        %p951 = scmp.eq.s32.totalorder %s681, 4
        %s952 = scalar_select %p951, 1, 0
        %s953 = scvt.s32.f32 %s952
        %v954 = vadd.f32 %v946, %v678
        %v955 = vstv %s953
        %v956 = vmul.f32 %v955, %v680
        %v957 = vadd.f32 %v954, %v956
        %s958 = scalar_lea.vmem %s366, 32 [#allocation5]
        %959 = vst [vmem:[%s958] sm:$0xff] %v957
        %v960 = vld [vmem:[%s6] sm:$0xff]
        %962 = vset.pattern.permute.xlu0 0
        %963 = vperm.xlu0 %962, %v960
        %v964 = vpop.permute.xlu0 %963
        %966 = vmatprep.subr.bf16.mxu0 0
        %967 = vmatpush1.bf16.msra.mxu0 0
        %968 = vmatprep.subr.bf16.mxu0 0
        %969 = vmatpush1.bf16.msra.mxu0 0
        %970 = vmatprep.subr.bf16.mxu0 0
        %971 = vmatpush1.bf16.msra.mxu0 0
        %972 = vmatprep.subr.bf16.mxu0 0
        %973 = vmatpush1.bf16.msra.mxu0 0
        %974 = vmatprep.subr.bf16.mxu0 0
        %975 = vmatpush1.bf16.msra.mxu0 0
        %976 = vmatprep.subr.bf16.mxu0 0
        %977 = vmatpush1.bf16.msra.mxu0 0
        %978 = vmatprep.subr.bf16.mxu0 0
        %979 = vmatpush1.bf16.msra.mxu0 %v674
        %980 = vmatprep.subr.bf16.mxu0 0
        %981 = vmatpush1.bf16.msra.mxu0 %v673
        %982 = vmatprep.subr.bf16.mxu0 0
        %983 = vmatpush2.bf16.msra.mxu0 0
        %984 = vmatprep.subr.bf16.mxu0 0
        %985 = vmatpush2.bf16.msra.mxu0 0
        %986 = vmatprep.subr.bf16.mxu0 0
        %987 = vmatpush2.bf16.msra.mxu0 0
        %988 = vmatprep.subr.bf16.mxu0 0
        %989 = vmatpush2.bf16.msra.mxu0 0
        %990 = vmatprep.subr.bf16.mxu0 0
        %991 = vmatpush2.bf16.msra.mxu0 0
        %992 = vmatprep.subr.bf16.mxu0 0
        %993 = vmatpush2.bf16.msra.mxu0 0
        %994 = vmatprep.subr.bf16.mxu0 0
        %995 = vmatpush2.bf16.msra.mxu0 0
        %996 = vmatprep.subr.bf16.mxu0 0
        %997 = vmatpush2.bf16.msra.mxu0 0
        %998 = vmatprep.mubr.bf16.mxu0 0
        %999 = vmatmul.mubr.bf16.gmra.mxu0 %v690
        %v1000 = vpop.f32.mrf.mxu0
        %v1001 = vadd.f32 %v964, %v1000
        %v1002 = vpop.f32.mrf.mxu0
        %v1003 = vpop.f32.mrf.mxu0
        %v1004 = vpop.f32.mrf.mxu0
        %1005 = vdwg.mxu0
        %p1006 = scmp.eq.s32.totalorder %s681, 5
        %s1007 = scalar_select %p1006, 1, 0
        %s1008 = scvt.s32.f32 %s1007
        %v1009 = vadd.f32 %v1001, %v678
        %v1010 = vstv %s1008
        %v1011 = vmul.f32 %v1010, %v680
        %v1012 = vadd.f32 %v1009, %v1011
        %s1013 = scalar_lea.vmem %s366, 40 [#allocation5]
        %1014 = vst [vmem:[%s1013] sm:$0xff] %v1012
        %v1015 = vld [vmem:[%s6] sm:$0xff]
        %1017 = vset.pattern.permute.xlu0 0
        %1018 = vperm.xlu0 %1017, %v1015
        %v1019 = vpop.permute.xlu0 %1018
        %1021 = vmatprep.subr.bf16.mxu0 0
        %1022 = vmatpush1.bf16.msra.mxu0 0
        %1023 = vmatprep.subr.bf16.mxu0 0
        %1024 = vmatpush1.bf16.msra.mxu0 0
        %1025 = vmatprep.subr.bf16.mxu0 0
        %1026 = vmatpush1.bf16.msra.mxu0 0
        %1027 = vmatprep.subr.bf16.mxu0 0
        %1028 = vmatpush1.bf16.msra.mxu0 0
        %1029 = vmatprep.subr.bf16.mxu0 0
        %1030 = vmatpush1.bf16.msra.mxu0 0
        %1031 = vmatprep.subr.bf16.mxu0 0
        %1032 = vmatpush1.bf16.msra.mxu0 0
        %1033 = vmatprep.subr.bf16.mxu0 0
        %1034 = vmatpush1.bf16.msra.mxu0 %v676
        %1035 = vmatprep.subr.bf16.mxu0 0
        %1036 = vmatpush1.bf16.msra.mxu0 %v675
        %1037 = vmatprep.subr.bf16.mxu0 0
        %1038 = vmatpush2.bf16.msra.mxu0 0
        %1039 = vmatprep.subr.bf16.mxu0 0
        %1040 = vmatpush2.bf16.msra.mxu0 0
        %1041 = vmatprep.subr.bf16.mxu0 0
        %1042 = vmatpush2.bf16.msra.mxu0 0
        %1043 = vmatprep.subr.bf16.mxu0 0
        %1044 = vmatpush2.bf16.msra.mxu0 0
        %1045 = vmatprep.subr.bf16.mxu0 0
        %1046 = vmatpush2.bf16.msra.mxu0 0
        %1047 = vmatprep.subr.bf16.mxu0 0
        %1048 = vmatpush2.bf16.msra.mxu0 0
        %1049 = vmatprep.subr.bf16.mxu0 0
        %1050 = vmatpush2.bf16.msra.mxu0 0
        %1051 = vmatprep.subr.bf16.mxu0 0
        %1052 = vmatpush2.bf16.msra.mxu0 0
        %1053 = vmatprep.mubr.bf16.mxu0 0
        %1054 = vmatmul.mubr.bf16.gmra.mxu0 %v690
        %v1055 = vpop.f32.mrf.mxu0
        %v1056 = vadd.f32 %v1019, %v1055
        %v1057 = vpop.f32.mrf.mxu0
        %v1058 = vpop.f32.mrf.mxu0
        %v1059 = vpop.f32.mrf.mxu0
        %1060 = vdwg.mxu0
        %p1061 = scmp.eq.s32.totalorder %s681, 6
        %s1062 = scalar_select %p1061, 1, 0
        %s1063 = scvt.s32.f32 %s1062
        %v1064 = vadd.f32 %v1056, %v678
        %v1065 = vstv %s1063
        %v1066 = vmul.f32 %v1065, %v680
        %v1067 = vadd.f32 %v1064, %v1066
        %s1068 = scalar_lea.vmem %s366, 48 [#allocation5]
        %1069 = vst [vmem:[%s1068] sm:$0xff] %v1067
        %s1070 = sand.u32 %s248, 1
        %s1071 = scalar_lea.sflag [#allocation3], %s1070
        %s1072 = sand.u32 %s248, 1
        %s1073 = smul.addr %s1072, 56
        %s1074 = scalar_lea.vmem [#allocation5], %s1073
        // Predicated region
        $region65: #{prototype_prompt_encoder_forward.3} parent=59 // pred_check
          %p1075 = pneg %p258
        $region66: #{prototype_prompt_encoder_forward.3} parent=59 // pred_check_branch
          %1077 = sbr.rel (%p1075) target = $region68
        $region67: #{prototype_prompt_encoder_forward.3} parent=59 // pred_region
          %s1079 = ssub.s32 896, 896
          %1080 = vsyncadd %s1071, %s1079
          %s1081 = smul.addr %s25, 7
          %s1082 = smul.addr %s1081, 128
          %s1083 = scalar_lea.hbm %s10, %s1082
          %s1084 = sshll.u32 %s1074, 4
          %s1085 = int_to_ptr.vmem [resolvable:$true] %s1084
          %1090 = dma.vmem_to_hbm [thread:$0]  %s1085, 896, %s1083, %s1071, 128, 128, 8
        $region68: #{prototype_prompt_encoder_forward.3} parent=59 // pred_fallthru
          _
      $region60: #{prototype_prompt_encoder_forward.3} parent=5 // pred_fallthru
        _
      %p1091 = scmp.le.s32.totalorder 2, %s20
      // Predicated region
      $region69: #{prototype_prompt_encoder_forward.3} parent=5 // pred_check
        %p1092 = pneg %p1091
      $region70: #{prototype_prompt_encoder_forward.3} parent=5 // pred_check_branch
        %1094 = sbr.rel (%p1092) target = $region72
      $region71: #{prototype_prompt_encoder_forward.3} parent=5 // pred_region
        %s1095 = ssub.s32 %s20, 2
        // Predicated region
        $region73: #{prototype_prompt_encoder_forward.3} parent=71 // pred_check
          %p1096 = pneg %p264
        $region74: #{prototype_prompt_encoder_forward.3} parent=71 // pred_check_branch
          %1098 = sbr.rel (%p1096) target = $region76
        $region75: #{prototype_prompt_encoder_forward.3} parent=71 // pred_region
          %s1099 = sand.u32 %s249, 1
          %s1100 = scalar_lea.sflag [#allocation3], %s1099
          %s1101 = sand.u32 %s249, 1
          %s1102 = smul.addr %s1101, 56
          %s1103 = scalar_lea.vmem [#allocation5], %s1102
          %1104 = dma.done %s1100, 896
        $region76: #{prototype_prompt_encoder_forward.3} parent=71 // pred_fallthru
          _
      $region72: #{prototype_prompt_encoder_forward.3} parent=5 // pred_fallthru
        _
    $region6: #{prototype_prompt_encoder_forward.3} parent=1 // loop_footer
      %s24 = sadd.s32 1, %s20
    $region7: #{prototype_prompt_encoder_forward.3} parent=1 // loop_footer_branch
      %19 = sbr.rel target = $region3
    $region8: #{prototype_prompt_encoder_forward.3} parent=1 // loop_exit
      _
    %1105 = vsyncpa [#allocation3], 1
    %s1106 = scalar_lea.sflag [#allocation3], 1
    %1107 = vsyncpa %s1106, 1
    %1108 = vsyncpa [#allocation4], 1
    %s1109 = scalar_lea.sflag [#allocation4], 1
    %1110 = vsyncpa %s1109, 1

</llo_original>
